<compile_context>
chip_gen: v5e
topology: v5e:2x2
jax: 0.10.0
libtpu: 0.0.40
codegen_flags: <defaults>
</compile_context>

<pallas_src>
import functools
import math

import jax
import jax.numpy as jnp
from jax import lax
from jax.experimental import pallas as pl
from jax.experimental.pallas import tpu as pltpu


def _tile(dim, pref):
    """Largest tile <= pref that divides dim (falls back to the full dim)."""
    t = min(pref, dim)
    return t if dim % t == 0 else dim


# ---------------------------------------------------------------------------
# Fused Q/K/V projection.
#   inputs : q/k/v (bs, S, E) f32, per-head weights (H, E, d_k) bf16,
#            per-head biases (H, 1, d_k) f32 (scale already folded into wq/bq).
#   outputs: head-major (bs, H, S, d_k) bf16 -- ready for the flash kernel,
#            no transposes anywhere.
# Weight / bias index_maps are constant, so they stay VMEM-resident across all
# (batch, S-tile) grid steps.
# ---------------------------------------------------------------------------
def _qkv_proj_kernel(q_ref, k_ref, v_ref,
                     wq_ref, wk_ref, wv_ref,
                     bq_ref, bk_ref, bv_ref,
                     qo_ref, ko_ref, vo_ref, *, heads):
    for x_ref, w_ref, b_ref, o_ref in (
        (q_ref, wq_ref, bq_ref, qo_ref),
        (k_ref, wk_ref, bk_ref, ko_ref),
        (v_ref, wv_ref, bv_ref, vo_ref),
    ):
        x = x_ref[0].astype(jnp.bfloat16)                    # (ts, E)
        for h in range(heads):                               # static unroll
            y = jnp.dot(x, w_ref[h],
                        preferred_element_type=jnp.float32) + b_ref[h]
            o_ref[0, h] = y.astype(jnp.bfloat16)             # (ts, d_k)


def pallas_qkv_proj(q, k, v, wq, wk, wv, bq, bk, bv, *, heads, ts=512):
    bs, S, E = q.shape
    d_k = E // heads
    ts = _tile(S, ts)                       # v6e/v5e: big M tiles (review)
    grid = (bs, S // ts)

    act_spec = pl.BlockSpec((1, ts, E), lambda b, si: (b, si, 0))
    w_spec = pl.BlockSpec((heads, E, d_k), lambda b, si: (0, 0, 0))
    b_spec = pl.BlockSpec((heads, 1, d_k), lambda b, si: (0, 0, 0))
    out_spec = pl.BlockSpec((1, heads, ts, d_k), lambda b, si: (b, 0, si, 0))

    M = bs * S
    cost = pl.CostEstimate(
        flops=3 * 2 * M * E * E,
        transcendentals=0,
        bytes_accessed=4 * 3 * M * E + 2 * (3 * E * E + 3 * M * E) + 4 * 3 * E,
    )
    return pl.pallas_call(
        functools.partial(_qkv_proj_kernel, heads=heads),
        out_shape=tuple(
            jax.ShapeDtypeStruct((bs, heads, S, d_k), jnp.bfloat16)
            for _ in range(3)),
        grid=grid,
        in_specs=[act_spec, act_spec, act_spec,
                  w_spec, w_spec, w_spec,
                  b_spec, b_spec, b_spec],
        out_specs=(out_spec, out_spec, out_spec),
        compiler_params=pltpu.CompilerParams(
            dimension_semantics=("parallel", "parallel"),
            vmem_limit_bytes=48 * 1024 * 1024),
        cost_estimate=cost,
    )(q, k, v, wq, wk, wv, bq, bk, bv)


# ---------------------------------------------------------------------------
# Flash-style attention: grid = (bs, H, q_tiles, kv_tiles), online softmax with
# running-max / running-sum / accumulator scratch.  q already carries the
# 1/sqrt(d_k) scale.  Scores are contracted on the shared last (d_k) dim, so
# there is no k-transpose relayout on the way into the MXU.  Softmax math is
# f32; both matmuls take bf16 operands with f32 accumulation.
# ---------------------------------------------------------------------------
def _flash_attn_kernel(q_ref, k_ref, v_ref, o_ref, m_scr, l_scr, acc_scr):
    ki = pl.program_id(3)

    @pl.when(ki == 0)
    def _():
        m_scr[...] = jnp.full_like(m_scr, -jnp.inf)
        l_scr[...] = jnp.zeros_like(l_scr)
        acc_scr[...] = jnp.zeros_like(acc_scr)

    q = q_ref[0, 0]                                          # (tq, d_k) bf16
    k = k_ref[0, 0]                                          # (tk, d_k) bf16
    v = v_ref[0, 0]                                          # (tk, d_k) bf16

    # s[q, k] = sum_d q[q, d] * k[k, d]   (scale folded into q projection)
    s = lax.dot_general(q, k, (((1,), (1,)), ((), ())),
                        preferred_element_type=jnp.float32)  # (tq, tk) f32

    m_prev = m_scr[...]
    m_new = jnp.maximum(m_prev, jnp.max(s, axis=-1, keepdims=True))
    alpha = jnp.exp(m_prev - m_new)
    p = jnp.exp(s - m_new)                                   # f32 (v5e-safe)
    l_scr[...] = alpha * l_scr[...] + jnp.sum(p, axis=-1, keepdims=True)
    acc_scr[...] = alpha * acc_scr[...] + jnp.dot(
        p.astype(v.dtype), v, preferred_element_type=jnp.float32)
    m_scr[...] = m_new

    # TODO(synk): attention mask / dropout omitted (eval-mode identity).
    @pl.when(ki == pl.num_programs(3) - 1)
    def _():
        # approx EUP reciprocal: ~2^-12 relative error, fine for eval forward.
        inv_l = pl.reciprocal(l_scr[...], approx=True)
        o_ref[0, 0] = (acc_scr[...] * inv_l).astype(o_ref.dtype)


def pallas_flash_attention(qh, kh, vh, *, tq=128, tk=128):
    bs, H, S, d_k = qh.shape
    tq = _tile(S, tq)
    tk = _tile(S, tk)
    grid = (bs, H, S // tq, S // tk)

    q_spec = pl.BlockSpec((1, 1, tq, d_k), lambda b, h, qi, ki: (b, h, qi, 0))
    kv_spec = pl.BlockSpec((1, 1, tk, d_k), lambda b, h, qi, ki: (b, h, ki, 0))
    o_spec = pl.BlockSpec((1, 1, tq, d_k), lambda b, h, qi, ki: (b, h, qi, 0))

    cost = pl.CostEstimate(
        flops=4 * bs * H * S * S * d_k,
        transcendentals=bs * H * S * S,
        bytes_accessed=2 * 4 * bs * H * S * d_k,
    )
    return pl.pallas_call(
        _flash_attn_kernel,
        out_shape=jax.ShapeDtypeStruct((bs, H, S, d_k), jnp.bfloat16),
        grid=grid,
        in_specs=[q_spec, kv_spec, kv_spec],
        out_specs=o_spec,
        scratch_shapes=[
            pltpu.VMEM((tq, 1), jnp.float32),     # running max
            pltpu.VMEM((tq, 1), jnp.float32),     # running sum
            pltpu.VMEM((tq, d_k), jnp.float32),   # accumulator
        ],
        compiler_params=pltpu.CompilerParams(
            dimension_semantics=("parallel", "parallel", "parallel",
                                 "arbitrary")),
        cost_estimate=cost,
    )(qh, kh, vh)


# ---------------------------------------------------------------------------
# Output projection: consumes head-major attention output (bs, H, S, d_k) and
# merges heads as a K-split accumulation over per-head (d_k, E) weight slices:
#   out[s, :] = sum_h attn[h, s, :] @ wo_h + bo
# so the store is lane-dense (last dim = E) and no head-merge transpose exists
# anywhere.  The weight index_map is constant -> DMA'd once, VMEM-resident.
# ---------------------------------------------------------------------------
def _out_proj_kernel(a_ref, wo_ref, bo_ref, o_ref, *, heads):
    acc = None
    for h in range(heads):                                   # static K-split
        d = jnp.dot(a_ref[0, h], wo_ref[h],
                    preferred_element_type=jnp.float32)      # (ts, E)
        acc = d if acc is None else acc + d
    o_ref[0] = acc + bo_ref[...]


def pallas_out_proj(attn, wo_h, bo, *, ts=512):
    bs, H, S, d_k = attn.shape
    E = H * d_k
    ts = _tile(S, ts)
    grid = (bs, S // ts)

    M = bs * S
    cost = pl.CostEstimate(
        flops=2 * M * E * E,
        transcendentals=0,
        bytes_accessed=2 * (M * E + E * E) + 4 * (M * E + E),
    )
    return pl.pallas_call(
        functools.partial(_out_proj_kernel, heads=H),
        out_shape=jax.ShapeDtypeStruct((bs, S, E), jnp.float32),
        grid=grid,
        in_specs=[
            pl.BlockSpec((1, H, ts, d_k), lambda b, si: (b, 0, si, 0)),
            pl.BlockSpec((H, d_k, E), lambda b, si: (0, 0, 0)),
            pl.BlockSpec((1, E), lambda b, si: (0, 0)),
        ],
        out_specs=pl.BlockSpec((1, ts, E), lambda b, si: (b, si, 0)),
        compiler_params=pltpu.CompilerParams(
            dimension_semantics=("parallel", "parallel"),
            vmem_limit_bytes=48 * 1024 * 1024),
        cost_estimate=cost,
    )(attn, wo_h, bo)


# ---------------------------------------------------------------------------
# Full MultiHeadAttention forward (matches the PyTorch module semantics).
# Wrapper only does one-time, tiny weight re-layouts (per-head slicing, bf16
# cast, 1/sqrt(d_k) folding) -- no activation transposes / HBM round trips.
# ---------------------------------------------------------------------------
def multi_head_attention(q, k, v, params, heads):
    bs, S, E = q.shape
    d_k = E // heads
    scale = 1.0 / math.sqrt(d_k)

    def split_w(w):                           # (E, E) -> (H, E, d_k)
        return jnp.transpose(w.reshape(E, heads, d_k), (1, 0, 2))

    def split_b(b):                           # (1, E) -> (H, 1, d_k)
        return b.reshape(heads, 1, d_k)

    wq = split_w(params["wq"] * scale).astype(jnp.bfloat16)   # scale folded in
    wk = split_w(params["wk"]).astype(jnp.bfloat16)
    wv = split_w(params["wv"]).astype(jnp.bfloat16)
    bq = split_b(params["bq"] * scale)
    bk = split_b(params["bk"])
    bv = split_b(params["bv"])

    qh, kh, vh = pallas_qkv_proj(q, k, v, wq, wk, wv, bq, bk, bv, heads=heads)

    attn = pallas_flash_attention(qh, kh, vh)                 # (bs, H, S, d_k)

    wo_h = params["wo"].reshape(heads, d_k, E).astype(jnp.bfloat16)
    out = pallas_out_proj(attn, wo_h, params["bo"])           # (bs, S, E) f32
    return out


# ---------------------------------------------------------------------------
# Deterministic parameter init (PyTorch nn.Linear default: U(-1/sqrt(in), .)).
# Weights are stored already transposed: (in_features, out_features).
# ---------------------------------------------------------------------------
def init_params(key, embedding_size):
    bound = 1.0 / math.sqrt(embedding_size)
    keys = jax.random.split(key, 8)
    names = ["wq", "bq", "wk", "bk", "wv", "bv", "wo", "bo"]
    params = {}
    for i, name in enumerate(names):
        if name.startswith("w"):
            shape = (embedding_size, embedding_size)
        else:
            shape = (1, embedding_size)
        params[name] = jax.random.uniform(
            keys[i], shape, jnp.float32, minval=-bound, maxval=bound
        )
    return params


if __name__ == "__main__":
    batch = 2
    seq = 8
    heads = 4
    embedding_size = 32

    key = jax.random.PRNGKey(0)
    kq, kk, kv, kp = jax.random.split(key, 4)
    q = jax.random.normal(kq, (batch, seq, embedding_size), jnp.float32)
    k = jax.random.normal(kk, (batch, seq, embedding_size), jnp.float32)
    v = jax.random.normal(kv, (batch, seq, embedding_size), jnp.float32)
    params = init_params(kp, embedding_size)

    out = multi_head_attention(q, k, v, params, heads)
    jax.block_until_ready(out)

    # quick sanity check against a pure-JAX f32 reference
    def ref_forward(q, k, v):
        bs, S, E = q.shape
        d_k = E // heads

        def proj(x, w, b):
            y = x.reshape(bs * S, E) @ w + b
            return jnp.transpose(y.reshape(bs, S, heads, d_k), (0, 2, 1, 3))

        qh, kh, vh = (proj(q, params["wq"], params["bq"]),
                      proj(k, params["wk"], params["bk"]),
                      proj(v, params["wv"], params["bv"]))
        s = jnp.einsum("bhqd,bhkd->bhqk", qh, kh) / math.sqrt(d_k)
        p = jax.nn.softmax(s, axis=-1)
        o = jnp.einsum("bhqk,bhkd->bhqd", p, vh)
        concat = jnp.transpose(o, (0, 2, 1, 3)).reshape(bs * S, E)
        return (concat @ params["wo"] + params["bo"]).reshape(bs, S, E)

    ref = ref_forward(q, k, v)
    # Tolerance reflects bf16 MXU operands (f32 accumulation) + the EUP approx
    # reciprocal in the softmax denominator; real bugs produce O(1) errors.
    assert jnp.allclose(out, ref, atol=5e-2, rtol=5e-2), "mismatch vs reference"

    print("KERNEL_OK")
</pallas_src>

<mosaic_0001>
module attributes {stable_mosaic.version = 11 : i64} {
  func.func @_qkv_proj_kernel(%arg0: i32, %arg1: i32, %arg2: memref<1x8x32xf32, #tpu.memory_space<vmem>>, %arg3: memref<1x8x32xf32, #tpu.memory_space<vmem>>, %arg4: memref<1x8x32xf32, #tpu.memory_space<vmem>>, %arg5: memref<4x32x8xbf16, #tpu.memory_space<vmem>>, %arg6: memref<4x32x8xbf16, #tpu.memory_space<vmem>>, %arg7: memref<4x32x8xbf16, #tpu.memory_space<vmem>>, %arg8: memref<4x1x8xf32, #tpu.memory_space<vmem>>, %arg9: memref<4x1x8xf32, #tpu.memory_space<vmem>>, %arg10: memref<4x1x8xf32, #tpu.memory_space<vmem>>, %arg11: memref<1x4x8x8xbf16, #tpu.memory_space<vmem>>, %arg12: memref<1x4x8x8xbf16, #tpu.memory_space<vmem>>, %arg13: memref<1x4x8x8xbf16, #tpu.memory_space<vmem>>) attributes {dimension_semantics = [#tpu.dimension_semantics<parallel>, #tpu.dimension_semantics<parallel>], iteration_bounds = array<i64: 2, 1>, scalar_prefetch = 0 : i64, scratch_operands = 0 : i64, tpu.core_type = #tpu.core_type<tc>, window_params = [{transform_indices = @transform_0, window_bounds = array<i64: 1, 8, 32>}, {transform_indices = @transform_1, window_bounds = array<i64: 1, 8, 32>}, {transform_indices = @transform_2, window_bounds = array<i64: 1, 8, 32>}, {pipeline_mode = #tpu.pipeline_mode<synchronous>, transform_indices = @transform_3, window_bounds = array<i64: 4, 32, 8>}, {pipeline_mode = #tpu.pipeline_mode<synchronous>, transform_indices = @transform_4, window_bounds = array<i64: 4, 32, 8>}, {pipeline_mode = #tpu.pipeline_mode<synchronous>, transform_indices = @transform_5, window_bounds = array<i64: 4, 32, 8>}, {pipeline_mode = #tpu.pipeline_mode<synchronous>, transform_indices = @transform_6, window_bounds = array<i64: 4, 1, 8>}, {pipeline_mode = #tpu.pipeline_mode<synchronous>, transform_indices = @transform_7, window_bounds = array<i64: 4, 1, 8>}, {pipeline_mode = #tpu.pipeline_mode<synchronous>, transform_indices = @transform_8, window_bounds = array<i64: 4, 1, 8>}, {transform_indices = @transform_9, window_bounds = array<i64: 1, 4, 8, 8>}, {transform_indices = @transform_10, window_bounds = array<i64: 1, 4, 8, 8>}, {transform_indices = @transform_11, window_bounds = array<i64: 1, 4, 8, 8>}]} {
    %c0 = arith.constant 0 : index
    %c0_0 = arith.constant 0 : index
    %c0_1 = arith.constant 0 : index
    %0 = vector.load %arg2[%c0, %c0_0, %c0_1] : memref<1x8x32xf32, #tpu.memory_space<vmem>>, vector<1x8x32xf32>
    %1 = vector.shape_cast %0 : vector<1x8x32xf32> to vector<8x32xf32>
    %2 = arith.truncf %1 : vector<8x32xf32> to vector<8x32xbf16>
    %c0_2 = arith.constant 0 : index
    %c0_3 = arith.constant 0 : index
    %c0_4 = arith.constant 0 : index
    %3 = vector.load %arg5[%c0_2, %c0_3, %c0_4] : memref<4x32x8xbf16, #tpu.memory_space<vmem>>, vector<1x32x8xbf16>
    %4 = vector.shape_cast %3 : vector<1x32x8xbf16> to vector<32x8xbf16>
    %cst = arith.constant dense<0.000000e+00> : vector<8x8xf32>
    %5 = tpu.matmul %2, %4, %cst {dimension_numbers = #tpu.dot_dimension_numbers<[1], [0], [0], [1], [0, 0, 1, 1], [], []>} : vector<8x32xbf16>, vector<32x8xbf16>, vector<8x8xf32> -> vector<8x8xf32>
    %c0_5 = arith.constant 0 : index
    %c0_6 = arith.constant 0 : index
    %c0_7 = arith.constant 0 : index
    %6 = vector.load %arg8[%c0_5, %c0_6, %c0_7] : memref<4x1x8xf32, #tpu.memory_space<vmem>>, vector<1x1x8xf32>
    %7 = vector.shape_cast %6 : vector<1x1x8xf32> to vector<1x8xf32>
    %8 = vector.broadcast %7 : vector<1x8xf32> to vector<8x8xf32>
    %9 = arith.addf %5, %8 : vector<8x8xf32>
    %10 = arith.truncf %9 : vector<8x8xf32> to vector<8x8xbf16>
    %c0_8 = arith.constant 0 : index
    %c0_9 = arith.constant 0 : index
    %c0_10 = arith.constant 0 : index
    %c0_11 = arith.constant 0 : index
    %11 = vector.load %arg11[%c0_8, %c0_9, %c0_10, %c0_11] : memref<1x4x8x8xbf16, #tpu.memory_space<vmem>>, vector<1x1x8x8xbf16>
    %12 = vector.shape_cast %11 : vector<1x1x8x8xbf16> to vector<8x8xbf16>
    %13 = vector.shape_cast %10 : vector<8x8xbf16> to vector<1x1x8x8xbf16>
    tpu.vector_store %arg11[%c0_8, %c0_9, %c0_10, %c0_11], %13 {strides = array<i32>} : memref<1x4x8x8xbf16, #tpu.memory_space<vmem>>, vector<1x1x8x8xbf16>,
    %c1 = arith.constant 1 : index
    %c0_12 = arith.constant 0 : index
    %c0_13 = arith.constant 0 : index
    %14 = vector.load %arg5[%c1, %c0_12, %c0_13] : memref<4x32x8xbf16, #tpu.memory_space<vmem>>, vector<1x32x8xbf16>
    %15 = vector.shape_cast %14 : vector<1x32x8xbf16> to vector<32x8xbf16>
    %cst_14 = arith.constant dense<0.000000e+00> : vector<8x8xf32>
    %16 = tpu.matmul %2, %15, %cst_14 {dimension_numbers = #tpu.dot_dimension_numbers<[1], [0], [0], [1], [0, 0, 1, 1], [], []>} : vector<8x32xbf16>, vector<32x8xbf16>, vector<8x8xf32> -> vector<8x8xf32>
    %c1_15 = arith.constant 1 : index
    %c0_16 = arith.constant 0 : index
    %c0_17 = arith.constant 0 : index
    %17 = vector.load %arg8[%c1_15, %c0_16, %c0_17] : memref<4x1x8xf32, #tpu.memory_space<vmem>>, vector<1x1x8xf32>
    %18 = vector.shape_cast %17 : vector<1x1x8xf32> to vector<1x8xf32>
    %19 = vector.broadcast %18 : vector<1x8xf32> to vector<8x8xf32>
    %20 = arith.addf %16, %19 : vector<8x8xf32>
    %21 = arith.truncf %20 : vector<8x8xf32> to vector<8x8xbf16>
    %c0_18 = arith.constant 0 : index
    %c1_19 = arith.constant 1 : index
    %c0_20 = arith.constant 0 : index
    %c0_21 = arith.constant 0 : index
    %22 = vector.load %arg11[%c0_18, %c1_19, %c0_20, %c0_21] : memref<1x4x8x8xbf16, #tpu.memory_space<vmem>>, vector<1x1x8x8xbf16>
    %23 = vector.shape_cast %22 : vector<1x1x8x8xbf16> to vector<8x8xbf16>
    %24 = vector.shape_cast %21 : vector<8x8xbf16> to vector<1x1x8x8xbf16>
    tpu.vector_store %arg11[%c0_18, %c1_19, %c0_20, %c0_21], %24 {strides = array<i32>} : memref<1x4x8x8xbf16, #tpu.memory_space<vmem>>, vector<1x1x8x8xbf16>,
    %c2 = arith.constant 2 : index
    %c0_22 = arith.constant 0 : index
    %c0_23 = arith.constant 0 : index
    %25 = vector.load %arg5[%c2, %c0_22, %c0_23] : memref<4x32x8xbf16, #tpu.memory_space<vmem>>, vector<1x32x8xbf16>
    %26 = vector.shape_cast %25 : vector<1x32x8xbf16> to vector<32x8xbf16>
    %cst_24 = arith.constant dense<0.000000e+00> : vector<8x8xf32>
    %27 = tpu.matmul %2, %26, %cst_24 {dimension_numbers = #tpu.dot_dimension_numbers<[1], [0], [0], [1], [0, 0, 1, 1], [], []>} : vector<8x32xbf16>, vector<32x8xbf16>, vector<8x8xf32> -> vector<8x8xf32>
    %c2_25 = arith.constant 2 : index
    %c0_26 = arith.constant 0 : index
    %c0_27 = arith.constant 0 : index
    %28 = vector.load %arg8[%c2_25, %c0_26, %c0_27] : memref<4x1x8xf32, #tpu.memory_space<vmem>>, vector<1x1x8xf32>
    %29 = vector.shape_cast %28 : vector<1x1x8xf32> to vector<1x8xf32>
    %30 = vector.broadcast %29 : vector<1x8xf32> to vector<8x8xf32>
    %31 = arith.addf %27, %30 : vector<8x8xf32>
    %32 = arith.truncf %31 : vector<8x8xf32> to vector<8x8xbf16>
    %c0_28 = arith.constant 0 : index
    %c2_29 = arith.constant 2 : index
    %c0_30 = arith.constant 0 : index
    %c0_31 = arith.constant 0 : index
    %33 = vector.load %arg11[%c0_28, %c2_29, %c0_30, %c0_31] : memref<1x4x8x8xbf16, #tpu.memory_space<vmem>>, vector<1x1x8x8xbf16>
    %34 = vector.shape_cast %33 : vector<1x1x8x8xbf16> to vector<8x8xbf16>
    %35 = vector.shape_cast %32 : vector<8x8xbf16> to vector<1x1x8x8xbf16>
    tpu.vector_store %arg11[%c0_28, %c2_29, %c0_30, %c0_31], %35 {strides = array<i32>} : memref<1x4x8x8xbf16, #tpu.memory_space<vmem>>, vector<1x1x8x8xbf16>,
    %c3 = arith.constant 3 : index
    %c0_32 = arith.constant 0 : index
    %c0_33 = arith.constant 0 : index
    %36 = vector.load %arg5[%c3, %c0_32, %c0_33] : memref<4x32x8xbf16, #tpu.memory_space<vmem>>, vector<1x32x8xbf16>
    %37 = vector.shape_cast %36 : vector<1x32x8xbf16> to vector<32x8xbf16>
    %cst_34 = arith.constant dense<0.000000e+00> : vector<8x8xf32>
    %38 = tpu.matmul %2, %37, %cst_34 {dimension_numbers = #tpu.dot_dimension_numbers<[1], [0], [0], [1], [0, 0, 1, 1], [], []>} : vector<8x32xbf16>, vector<32x8xbf16>, vector<8x8xf32> -> vector<8x8xf32>
    %c3_35 = arith.constant 3 : index
    %c0_36 = arith.constant 0 : index
    %c0_37 = arith.constant 0 : index
    %39 = vector.load %arg8[%c3_35, %c0_36, %c0_37] : memref<4x1x8xf32, #tpu.memory_space<vmem>>, vector<1x1x8xf32>
    %40 = vector.shape_cast %39 : vector<1x1x8xf32> to vector<1x8xf32>
    %41 = vector.broadcast %40 : vector<1x8xf32> to vector<8x8xf32>
    %42 = arith.addf %38, %41 : vector<8x8xf32>
    %43 = arith.truncf %42 : vector<8x8xf32> to vector<8x8xbf16>
    %c0_38 = arith.constant 0 : index
    %c3_39 = arith.constant 3 : index
    %c0_40 = arith.constant 0 : index
    %c0_41 = arith.constant 0 : index
    %44 = vector.load %arg11[%c0_38, %c3_39, %c0_40, %c0_41] : memref<1x4x8x8xbf16, #tpu.memory_space<vmem>>, vector<1x1x8x8xbf16>
    %45 = vector.shape_cast %44 : vector<1x1x8x8xbf16> to vector<8x8xbf16>
    %46 = vector.shape_cast %43 : vector<8x8xbf16> to vector<1x1x8x8xbf16>
    tpu.vector_store %arg11[%c0_38, %c3_39, %c0_40, %c0_41], %46 {strides = array<i32>} : memref<1x4x8x8xbf16, #tpu.memory_space<vmem>>, vector<1x1x8x8xbf16>,
    %c0_42 = arith.constant 0 : index
    %c0_43 = arith.constant 0 : index
    %c0_44 = arith.constant 0 : index
    %47 = vector.load %arg3[%c0_42, %c0_43, %c0_44] : memref<1x8x32xf32, #tpu.memory_space<vmem>>, vector<1x8x32xf32>
    %48 = vector.shape_cast %47 : vector<1x8x32xf32> to vector<8x32xf32>
    %49 = arith.truncf %48 : vector<8x32xf32> to vector<8x32xbf16>
    %c0_45 = arith.constant 0 : index
    %c0_46 = arith.constant 0 : index
    %c0_47 = arith.constant 0 : index
    %50 = vector.load %arg6[%c0_45, %c0_46, %c0_47] : memref<4x32x8xbf16, #tpu.memory_space<vmem>>, vector<1x32x8xbf16>
    %51 = vector.shape_cast %50 : vector<1x32x8xbf16> to vector<32x8xbf16>
    %cst_48 = arith.constant dense<0.000000e+00> : vector<8x8xf32>
    %52 = tpu.matmul %49, %51, %cst_48 {dimension_numbers = #tpu.dot_dimension_numbers<[1], [0], [0], [1], [0, 0, 1, 1], [], []>} : vector<8x32xbf16>, vector<32x8xbf16>, vector<8x8xf32> -> vector<8x8xf32>
    %c0_49 = arith.constant 0 : index
    %c0_50 = arith.constant 0 : index
    %c0_51 = arith.constant 0 : index
    %53 = vector.load %arg9[%c0_49, %c0_50, %c0_51] : memref<4x1x8xf32, #tpu.memory_space<vmem>>, vector<1x1x8xf32>
    %54 = vector.shape_cast %53 : vector<1x1x8xf32> to vector<1x8xf32>
    %55 = vector.broadcast %54 : vector<1x8xf32> to vector<8x8xf32>
    %56 = arith.addf %52, %55 : vector<8x8xf32>
    %57 = arith.truncf %56 : vector<8x8xf32> to vector<8x8xbf16>
    %c0_52 = arith.constant 0 : index
    %c0_53 = arith.constant 0 : index
    %c0_54 = arith.constant 0 : index
    %c0_55 = arith.constant 0 : index
    %58 = vector.load %arg12[%c0_52, %c0_53, %c0_54, %c0_55] : memref<1x4x8x8xbf16, #tpu.memory_space<vmem>>, vector<1x1x8x8xbf16>
    %59 = vector.shape_cast %58 : vector<1x1x8x8xbf16> to vector<8x8xbf16>
    %60 = vector.shape_cast %57 : vector<8x8xbf16> to vector<1x1x8x8xbf16>
    tpu.vector_store %arg12[%c0_52, %c0_53, %c0_54, %c0_55], %60 {strides = array<i32>} : memref<1x4x8x8xbf16, #tpu.memory_space<vmem>>, vector<1x1x8x8xbf16>,
    %c1_56 = arith.constant 1 : index
    %c0_57 = arith.constant 0 : index
    %c0_58 = arith.constant 0 : index
    %61 = vector.load %arg6[%c1_56, %c0_57, %c0_58] : memref<4x32x8xbf16, #tpu.memory_space<vmem>>, vector<1x32x8xbf16>
    %62 = vector.shape_cast %61 : vector<1x32x8xbf16> to vector<32x8xbf16>
    %cst_59 = arith.constant dense<0.000000e+00> : vector<8x8xf32>
    %63 = tpu.matmul %49, %62, %cst_59 {dimension_numbers = #tpu.dot_dimension_numbers<[1], [0], [0], [1], [0, 0, 1, 1], [], []>} : vector<8x32xbf16>, vector<32x8xbf16>, vector<8x8xf32> -> vector<8x8xf32>
    %c1_60 = arith.constant 1 : index
    %c0_61 = arith.constant 0 : index
    %c0_62 = arith.constant 0 : index
    %64 = vector.load %arg9[%c1_60, %c0_61, %c0_62] : memref<4x1x8xf32, #tpu.memory_space<vmem>>, vector<1x1x8xf32>
    %65 = vector.shape_cast %64 : vector<1x1x8xf32> to vector<1x8xf32>
    %66 = vector.broadcast %65 : vector<1x8xf32> to vector<8x8xf32>
    %67 = arith.addf %63, %66 : vector<8x8xf32>
    %68 = arith.truncf %67 : vector<8x8xf32> to vector<8x8xbf16>
    %c0_63 = arith.constant 0 : index
    %c1_64 = arith.constant 1 : index
    %c0_65 = arith.constant 0 : index
    %c0_66 = arith.constant 0 : index
    %69 = vector.load %arg12[%c0_63, %c1_64, %c0_65, %c0_66] : memref<1x4x8x8xbf16, #tpu.memory_space<vmem>>, vector<1x1x8x8xbf16>
    %70 = vector.shape_cast %69 : vector<1x1x8x8xbf16> to vector<8x8xbf16>
    %71 = vector.shape_cast %68 : vector<8x8xbf16> to vector<1x1x8x8xbf16>
    tpu.vector_store %arg12[%c0_63, %c1_64, %c0_65, %c0_66], %71 {strides = array<i32>} : memref<1x4x8x8xbf16, #tpu.memory_space<vmem>>, vector<1x1x8x8xbf16>,
    %c2_67 = arith.constant 2 : index
    %c0_68 = arith.constant 0 : index
    %c0_69 = arith.constant 0 : index
    %72 = vector.load %arg6[%c2_67, %c0_68, %c0_69] : memref<4x32x8xbf16, #tpu.memory_space<vmem>>, vector<1x32x8xbf16>
    %73 = vector.shape_cast %72 : vector<1x32x8xbf16> to vector<32x8xbf16>
    %cst_70 = arith.constant dense<0.000000e+00> : vector<8x8xf32>
    %74 = tpu.matmul %49, %73, %cst_70 {dimension_numbers = #tpu.dot_dimension_numbers<[1], [0], [0], [1], [0, 0, 1, 1], [], []>} : vector<8x32xbf16>, vector<32x8xbf16>, vector<8x8xf32> -> vector<8x8xf32>
    %c2_71 = arith.constant 2 : index
    %c0_72 = arith.constant 0 : index
    %c0_73 = arith.constant 0 : index
    %75 = vector.load %arg9[%c2_71, %c0_72, %c0_73] : memref<4x1x8xf32, #tpu.memory_space<vmem>>, vector<1x1x8xf32>
    %76 = vector.shape_cast %75 : vector<1x1x8xf32> to vector<1x8xf32>
    %77 = vector.broadcast %76 : vector<1x8xf32> to vector<8x8xf32>
    %78 = arith.addf %74, %77 : vector<8x8xf32>
    %79 = arith.truncf %78 : vector<8x8xf32> to vector<8x8xbf16>
    %c0_74 = arith.constant 0 : index
    %c2_75 = arith.constant 2 : index
    %c0_76 = arith.constant 0 : index
    %c0_77 = arith.constant 0 : index
    %80 = vector.load %arg12[%c0_74, %c2_75, %c0_76, %c0_77] : memref<1x4x8x8xbf16, #tpu.memory_space<vmem>>, vector<1x1x8x8xbf16>
    %81 = vector.shape_cast %80 : vector<1x1x8x8xbf16> to vector<8x8xbf16>
    %82 = vector.shape_cast %79 : vector<8x8xbf16> to vector<1x1x8x8xbf16>
    tpu.vector_store %arg12[%c0_74, %c2_75, %c0_76, %c0_77], %82 {strides = array<i32>} : memref<1x4x8x8xbf16, #tpu.memory_space<vmem>>, vector<1x1x8x8xbf16>,
    %c3_78 = arith.constant 3 : index
    %c0_79 = arith.constant 0 : index
    %c0_80 = arith.constant 0 : index
    %83 = vector.load %arg6[%c3_78, %c0_79, %c0_80] : memref<4x32x8xbf16, #tpu.memory_space<vmem>>, vector<1x32x8xbf16>
    %84 = vector.shape_cast %83 : vector<1x32x8xbf16> to vector<32x8xbf16>
    %cst_81 = arith.constant dense<0.000000e+00> : vector<8x8xf32>
    %85 = tpu.matmul %49, %84, %cst_81 {dimension_numbers = #tpu.dot_dimension_numbers<[1], [0], [0], [1], [0, 0, 1, 1], [], []>} : vector<8x32xbf16>, vector<32x8xbf16>, vector<8x8xf32> -> vector<8x8xf32>
    %c3_82 = arith.constant 3 : index
    %c0_83 = arith.constant 0 : index
    %c0_84 = arith.constant 0 : index
    %86 = vector.load %arg9[%c3_82, %c0_83, %c0_84] : memref<4x1x8xf32, #tpu.memory_space<vmem>>, vector<1x1x8xf32>
    %87 = vector.shape_cast %86 : vector<1x1x8xf32> to vector<1x8xf32>
    %88 = vector.broadcast %87 : vector<1x8xf32> to vector<8x8xf32>
    %89 = arith.addf %85, %88 : vector<8x8xf32>
    %90 = arith.truncf %89 : vector<8x8xf32> to vector<8x8xbf16>
    %c0_85 = arith.constant 0 : index
    %c3_86 = arith.constant 3 : index
    %c0_87 = arith.constant 0 : index
    %c0_88 = arith.constant 0 : index
    %91 = vector.load %arg12[%c0_85, %c3_86, %c0_87, %c0_88] : memref<1x4x8x8xbf16, #tpu.memory_space<vmem>>, vector<1x1x8x8xbf16>
    %92 = vector.shape_cast %91 : vector<1x1x8x8xbf16> to vector<8x8xbf16>
    %93 = vector.shape_cast %90 : vector<8x8xbf16> to vector<1x1x8x8xbf16>
    tpu.vector_store %arg12[%c0_85, %c3_86, %c0_87, %c0_88], %93 {strides = array<i32>} : memref<1x4x8x8xbf16, #tpu.memory_space<vmem>>, vector<1x1x8x8xbf16>,
    %c0_89 = arith.constant 0 : index
    %c0_90 = arith.constant 0 : index
    %c0_91 = arith.constant 0 : index
    %94 = vector.load %arg4[%c0_89, %c0_90, %c0_91] : memref<1x8x32xf32, #tpu.memory_space<vmem>>, vector<1x8x32xf32>
    %95 = vector.shape_cast %94 : vector<1x8x32xf32> to vector<8x32xf32>
    %96 = arith.truncf %95 : vector<8x32xf32> to vector<8x32xbf16>
    %c0_92 = arith.constant 0 : index
    %c0_93 = arith.constant 0 : index
    %c0_94 = arith.constant 0 : index
    %97 = vector.load %arg7[%c0_92, %c0_93, %c0_94] : memref<4x32x8xbf16, #tpu.memory_space<vmem>>, vector<1x32x8xbf16>
    %98 = vector.shape_cast %97 : vector<1x32x8xbf16> to vector<32x8xbf16>
    %cst_95 = arith.constant dense<0.000000e+00> : vector<8x8xf32>
    %99 = tpu.matmul %96, %98, %cst_95 {dimension_numbers = #tpu.dot_dimension_numbers<[1], [0], [0], [1], [0, 0, 1, 1], [], []>} : vector<8x32xbf16>, vector<32x8xbf16>, vector<8x8xf32> -> vector<8x8xf32>
    %c0_96 = arith.constant 0 : index
    %c0_97 = arith.constant 0 : index
    %c0_98 = arith.constant 0 : index
    %100 = vector.load %arg10[%c0_96, %c0_97, %c0_98] : memref<4x1x8xf32, #tpu.memory_space<vmem>>, vector<1x1x8xf32>
    %101 = vector.shape_cast %100 : vector<1x1x8xf32> to vector<1x8xf32>
    %102 = vector.broadcast %101 : vector<1x8xf32> to vector<8x8xf32>
    %103 = arith.addf %99, %102 : vector<8x8xf32>
    %104 = arith.truncf %103 : vector<8x8xf32> to vector<8x8xbf16>
    %c0_99 = arith.constant 0 : index
    %c0_100 = arith.constant 0 : index
    %c0_101 = arith.constant 0 : index
    %c0_102 = arith.constant 0 : index
    %105 = vector.load %arg13[%c0_99, %c0_100, %c0_101, %c0_102] : memref<1x4x8x8xbf16, #tpu.memory_space<vmem>>, vector<1x1x8x8xbf16>
    %106 = vector.shape_cast %105 : vector<1x1x8x8xbf16> to vector<8x8xbf16>
    %107 = vector.shape_cast %104 : vector<8x8xbf16> to vector<1x1x8x8xbf16>
    tpu.vector_store %arg13[%c0_99, %c0_100, %c0_101, %c0_102], %107 {strides = array<i32>} : memref<1x4x8x8xbf16, #tpu.memory_space<vmem>>, vector<1x1x8x8xbf16>,
    %c1_103 = arith.constant 1 : index
    %c0_104 = arith.constant 0 : index
    %c0_105 = arith.constant 0 : index
    %108 = vector.load %arg7[%c1_103, %c0_104, %c0_105] : memref<4x32x8xbf16, #tpu.memory_space<vmem>>, vector<1x32x8xbf16>
    %109 = vector.shape_cast %108 : vector<1x32x8xbf16> to vector<32x8xbf16>
    %cst_106 = arith.constant dense<0.000000e+00> : vector<8x8xf32>
    %110 = tpu.matmul %96, %109, %cst_106 {dimension_numbers = #tpu.dot_dimension_numbers<[1], [0], [0], [1], [0, 0, 1, 1], [], []>} : vector<8x32xbf16>, vector<32x8xbf16>, vector<8x8xf32> -> vector<8x8xf32>
    %c1_107 = arith.constant 1 : index
    %c0_108 = arith.constant 0 : index
    %c0_109 = arith.constant 0 : index
    %111 = vector.load %arg10[%c1_107, %c0_108, %c0_109] : memref<4x1x8xf32, #tpu.memory_space<vmem>>, vector<1x1x8xf32>
    %112 = vector.shape_cast %111 : vector<1x1x8xf32> to vector<1x8xf32>
    %113 = vector.broadcast %112 : vector<1x8xf32> to vector<8x8xf32>
    %114 = arith.addf %110, %113 : vector<8x8xf32>
    %115 = arith.truncf %114 : vector<8x8xf32> to vector<8x8xbf16>
    %c0_110 = arith.constant 0 : index
    %c1_111 = arith.constant 1 : index
    %c0_112 = arith.constant 0 : index
    %c0_113 = arith.constant 0 : index
    %116 = vector.load %arg13[%c0_110, %c1_111, %c0_112, %c0_113] : memref<1x4x8x8xbf16, #tpu.memory_space<vmem>>, vector<1x1x8x8xbf16>
    %117 = vector.shape_cast %116 : vector<1x1x8x8xbf16> to vector<8x8xbf16>
    %118 = vector.shape_cast %115 : vector<8x8xbf16> to vector<1x1x8x8xbf16>
    tpu.vector_store %arg13[%c0_110, %c1_111, %c0_112, %c0_113], %118 {strides = array<i32>} : memref<1x4x8x8xbf16, #tpu.memory_space<vmem>>, vector<1x1x8x8xbf16>,
    %c2_114 = arith.constant 2 : index
    %c0_115 = arith.constant 0 : index
    %c0_116 = arith.constant 0 : index
    %119 = vector.load %arg7[%c2_114, %c0_115, %c0_116] : memref<4x32x8xbf16, #tpu.memory_space<vmem>>, vector<1x32x8xbf16>
    %120 = vector.shape_cast %119 : vector<1x32x8xbf16> to vector<32x8xbf16>
    %cst_117 = arith.constant dense<0.000000e+00> : vector<8x8xf32>
    %121 = tpu.matmul %96, %120, %cst_117 {dimension_numbers = #tpu.dot_dimension_numbers<[1], [0], [0], [1], [0, 0, 1, 1], [], []>} : vector<8x32xbf16>, vector<32x8xbf16>, vector<8x8xf32> -> vector<8x8xf32>
    %c2_118 = arith.constant 2 : index
    %c0_119 = arith.constant 0 : index
    %c0_120 = arith.constant 0 : index
    %122 = vector.load %arg10[%c2_118, %c0_119, %c0_120] : memref<4x1x8xf32, #tpu.memory_space<vmem>>, vector<1x1x8xf32>
    %123 = vector.shape_cast %122 : vector<1x1x8xf32> to vector<1x8xf32>
    %124 = vector.broadcast %123 : vector<1x8xf32> to vector<8x8xf32>
    %125 = arith.addf %121, %124 : vector<8x8xf32>
    %126 = arith.truncf %125 : vector<8x8xf32> to vector<8x8xbf16>
    %c0_121 = arith.constant 0 : index
    %c2_122 = arith.constant 2 : index
    %c0_123 = arith.constant 0 : index
    %c0_124 = arith.constant 0 : index
    %127 = vector.load %arg13[%c0_121, %c2_122, %c0_123, %c0_124] : memref<1x4x8x8xbf16, #tpu.memory_space<vmem>>, vector<1x1x8x8xbf16>
    %128 = vector.shape_cast %127 : vector<1x1x8x8xbf16> to vector<8x8xbf16>
    %129 = vector.shape_cast %126 : vector<8x8xbf16> to vector<1x1x8x8xbf16>
    tpu.vector_store %arg13[%c0_121, %c2_122, %c0_123, %c0_124], %129 {strides = array<i32>} : memref<1x4x8x8xbf16, #tpu.memory_space<vmem>>, vector<1x1x8x8xbf16>,
    %c3_125 = arith.constant 3 : index
    %c0_126 = arith.constant 0 : index
    %c0_127 = arith.constant 0 : index
    %130 = vector.load %arg7[%c3_125, %c0_126, %c0_127] : memref<4x32x8xbf16, #tpu.memory_space<vmem>>, vector<1x32x8xbf16>
    %131 = vector.shape_cast %130 : vector<1x32x8xbf16> to vector<32x8xbf16>
    %cst_128 = arith.constant dense<0.000000e+00> : vector<8x8xf32>
    %132 = tpu.matmul %96, %131, %cst_128 {dimension_numbers = #tpu.dot_dimension_numbers<[1], [0], [0], [1], [0, 0, 1, 1], [], []>} : vector<8x32xbf16>, vector<32x8xbf16>, vector<8x8xf32> -> vector<8x8xf32>
    %c3_129 = arith.constant 3 : index
    %c0_130 = arith.constant 0 : index
    %c0_131 = arith.constant 0 : index
    %133 = vector.load %arg10[%c3_129, %c0_130, %c0_131] : memref<4x1x8xf32, #tpu.memory_space<vmem>>, vector<1x1x8xf32>
    %134 = vector.shape_cast %133 : vector<1x1x8xf32> to vector<1x8xf32>
    %135 = vector.broadcast %134 : vector<1x8xf32> to vector<8x8xf32>
    %136 = arith.addf %132, %135 : vector<8x8xf32>
    %137 = arith.truncf %136 : vector<8x8xf32> to vector<8x8xbf16>
    %c0_132 = arith.constant 0 : index
    %c3_133 = arith.constant 3 : index
    %c0_134 = arith.constant 0 : index
    %c0_135 = arith.constant 0 : index
    %138 = vector.load %arg13[%c0_132, %c3_133, %c0_134, %c0_135] : memref<1x4x8x8xbf16, #tpu.memory_space<vmem>>, vector<1x1x8x8xbf16>
    %139 = vector.shape_cast %138 : vector<1x1x8x8xbf16> to vector<8x8xbf16>
    %140 = vector.shape_cast %137 : vector<8x8xbf16> to vector<1x1x8x8xbf16>
    tpu.vector_store %arg13[%c0_132, %c3_133, %c0_134, %c0_135], %140 {strides = array<i32>} : memref<1x4x8x8xbf16, #tpu.memory_space<vmem>>, vector<1x1x8x8xbf16>,
    return
  }
  func.func @transform_0(%arg0: i32, %arg1: i32) -> (i32, i32, i32) {
    %c0_i32 = arith.constant 0 : i32
    %c0_i32_0 = arith.constant 0 : i32
    return %arg0, %arg1, %c0_i32 : i32, i32, i32
  }
  func.func @transform_1(%arg0: i32, %arg1: i32) -> (i32, i32, i32) {
    %c0_i32 = arith.constant 0 : i32
    %c0_i32_0 = arith.constant 0 : i32
    return %arg0, %arg1, %c0_i32 : i32, i32, i32
  }
  func.func @transform_2(%arg0: i32, %arg1: i32) -> (i32, i32, i32) {
    %c0_i32 = arith.constant 0 : i32
    %c0_i32_0 = arith.constant 0 : i32
    return %arg0, %arg1, %c0_i32 : i32, i32, i32
  }
  func.func @transform_3(%arg0: i32, %arg1: i32) -> (i32, i32, i32) {
    %c0_i32 = arith.constant 0 : i32
    %c0_i32_0 = arith.constant 0 : i32
    %c0_i32_1 = arith.constant 0 : i32
    %c0_i32_2 = arith.constant 0 : i32
    return %c0_i32, %c0_i32_0, %c0_i32_1 : i32, i32, i32
  }
  func.func @transform_4(%arg0: i32, %arg1: i32) -> (i32, i32, i32) {
    %c0_i32 = arith.constant 0 : i32
    %c0_i32_0 = arith.constant 0 : i32
    %c0_i32_1 = arith.constant 0 : i32
    %c0_i32_2 = arith.constant 0 : i32
    return %c0_i32, %c0_i32_0, %c0_i32_1 : i32, i32, i32
  }
  func.func @transform_5(%arg0: i32, %arg1: i32) -> (i32, i32, i32) {
    %c0_i32 = arith.constant 0 : i32
    %c0_i32_0 = arith.constant 0 : i32
    %c0_i32_1 = arith.constant 0 : i32
    %c0_i32_2 = arith.constant 0 : i32
    return %c0_i32, %c0_i32_0, %c0_i32_1 : i32, i32, i32
  }
  func.func @transform_6(%arg0: i32, %arg1: i32) -> (i32, i32, i32) {
    %c0_i32 = arith.constant 0 : i32
    %c0_i32_0 = arith.constant 0 : i32
    %c0_i32_1 = arith.constant 0 : i32
    %c0_i32_2 = arith.constant 0 : i32
    return %c0_i32, %c0_i32_0, %c0_i32_1 : i32, i32, i32
  }
  func.func @transform_7(%arg0: i32, %arg1: i32) -> (i32, i32, i32) {
    %c0_i32 = arith.constant 0 : i32
    %c0_i32_0 = arith.constant 0 : i32
    %c0_i32_1 = arith.constant 0 : i32
    %c0_i32_2 = arith.constant 0 : i32
    return %c0_i32, %c0_i32_0, %c0_i32_1 : i32, i32, i32
  }
  func.func @transform_8(%arg0: i32, %arg1: i32) -> (i32, i32, i32) {
    %c0_i32 = arith.constant 0 : i32
    %c0_i32_0 = arith.constant 0 : i32
    %c0_i32_1 = arith.constant 0 : i32
    %c0_i32_2 = arith.constant 0 : i32
    return %c0_i32, %c0_i32_0, %c0_i32_1 : i32, i32, i32
  }
  func.func @transform_9(%arg0: i32, %arg1: i32) -> (i32, i32, i32, i32) {
    %c0_i32 = arith.constant 0 : i32
    %c0_i32_0 = arith.constant 0 : i32
    %c0_i32_1 = arith.constant 0 : i32
    return %arg0, %c0_i32, %arg1, %c0_i32_0 : i32, i32, i32, i32
  }
  func.func @transform_10(%arg0: i32, %arg1: i32) -> (i32, i32, i32, i32) {
    %c0_i32 = arith.constant 0 : i32
    %c0_i32_0 = arith.constant 0 : i32
    %c0_i32_1 = arith.constant 0 : i32
    return %arg0, %c0_i32, %arg1, %c0_i32_0 : i32, i32, i32, i32
  }
  func.func @transform_11(%arg0: i32, %arg1: i32) -> (i32, i32, i32, i32) {
    %c0_i32 = arith.constant 0 : i32
    %c0_i32_0 = arith.constant 0 : i32
    %c0_i32_1 = arith.constant 0 : i32
    return %arg0, %c0_i32, %arg1, %c0_i32_0 : i32, i32, i32, i32
  }
}

</mosaic_0001>

<llo_original>
// kernel: tpu_custom_call.1
$region0: #{tpu_custom_call.1}
  #allocation0 [shape = 'u32[]', space=smem, size = 0x4, offset = 0x4, fixed_abs, tag = 'smem constant byte address 0x4 - core index']
  #allocation1 [shape = 'u32[72,128]{1,0:T(1,128)}', space=vmem, size = 0x9000, scoped, tag = 'internal scratch']
  %s0 = inlined_call_operand.vmem [shape: f32[2,8,32], index: 0, kind: input, shape index: {}]
  %s1 = inlined_call_operand.vmem [shape: f32[2,8,32], index: 1, kind: input, shape index: {}]
  %s2 = inlined_call_operand.vmem [shape: f32[2,8,32], index: 2, kind: input, shape index: {}]
  %s3 = inlined_call_operand.vmem [shape: bf16[4,32,8], index: 3, kind: input, shape index: {}]
  %s4 = inlined_call_operand.vmem [shape: bf16[4,32,8], index: 4, kind: input, shape index: {}]
  %s5 = inlined_call_operand.vmem [shape: bf16[4,32,8], index: 5, kind: input, shape index: {}]
  %s6 = inlined_call_operand.vmem [shape: f32[4,1,8], index: 6, kind: input, shape index: {}]
  %s7 = inlined_call_operand.vmem [shape: f32[4,1,8], index: 7, kind: input, shape index: {}]
  %s8 = inlined_call_operand.vmem [shape: f32[4,1,8], index: 8, kind: input, shape index: {}]
  %s9 = inlined_call_operand.hbm [shape: bf16[2,4,8,8], index: 9, kind: output, shape index: {0}]
  %s10 = inlined_call_operand.hbm [shape: bf16[2,4,8,8], index: 10, kind: output, shape index: {1}]
  %s11 = inlined_call_operand.hbm [shape: bf16[2,4,8,8], index: 11, kind: output, shape index: {2}]
  %12 = xla_tuple %s9, %s10, %s11
  %s13 = sld [smem:[#allocation0]]
  $region85: #{tpu_custom_call.1} parent=0
    _
  %s15 = ssub.s32 1, %s13
  %s16 = scalar_select 0, %s15, %s13
  $region1: #{tpu_custom_call.1} parent=0
    #allocation2 [shape = 'u8[16384]{0}', space=vmem, size = 0x4000, scoped, tag = 'output window, operand 0']
    #allocation3 [shape = 's32[2]{0}', space=sflag, size = 0x8, scoped, tag = 'scoped memory for tpu_custom_call.1']
    #allocation4 [shape = 'u8[16384]{0}', space=vmem, size = 0x4000, scoped, tag = 'output window, operand 1']
    #allocation5 [shape = 's32[2]{0}', space=sflag, size = 0x8, scoped, tag = 'scoped memory for tpu_custom_call.1']
    #allocation6 [shape = 'u8[16384]{0}', space=vmem, size = 0x4000, scoped, tag = 'output window, operand 2']
    %17 = vsyncpa [#allocation3], 0
    %s18 = scalar_lea.sflag [#allocation3], 1
    %19 = vsyncpa %s18, 0
    %20 = vsyncpa [#allocation5], 0
    %s21 = scalar_lea.sflag [#allocation5], 1
    %22 = vsyncpa %s21, 0
    loop: start=0, step=1, limit=4
    $region2: #{tpu_custom_call.1} parent=1 // loop_pre_header
      _
    $region3: #{tpu_custom_call.1} parent=1 // loop_header
      %s24 = sphi 0, %s28
      %p25 = scmp.ge.s32.totalorder %s24, 4
      %s31 = sphi 0, %s43
      %s32 = sphi 0, %s39
      %s33 = sphi 0, %s31
      %s34 = sphi 0, %s32
      %s35 = sphi 0, %s33
      %s36 = sphi 0, %s34
      %s48 = sphi 0, %s50
      %s51 = sphi 0, %s48
      %s52 = sphi 0, %s51
      %s68 = sphi 0, %s52
      %s76 = sphi 0, %s78
      %s79 = sphi 0, %s76
      %s80 = sphi 0, %s79
      %s96 = sphi 0, %s80
      %s104 = sphi 0, %s106
      %s107 = sphi 0, %s104
      %s108 = sphi 0, %s107
      %s124 = sphi 0, %s108
      %s128 = sphi 0, %s128
      %s130 = sphi 0, %s128
      %s131 = sphi 0, %s130
      %s145 = sphi 0, %s131
      %s149 = sphi 0, %s149
      %s151 = sphi 0, %s149
      %s152 = sphi 0, %s151
      %s166 = sphi 0, %s152
      %s170 = sphi 0, %s170
      %s172 = sphi 0, %s170
      %s173 = sphi 0, %s172
      %s187 = sphi 0, %s173
      %s191 = sphi 0, %s191
      %s193 = sphi 0, %s191
      %s194 = sphi 0, %s193
      %s208 = sphi 0, %s194
      %s212 = sphi 0, %s212
      %s214 = sphi 0, %s212
      %s215 = sphi 0, %s214
      %s229 = sphi 0, %s215
      %s233 = sphi 0, %s233
      %s235 = sphi 0, %s233
      %s236 = sphi 0, %s235
      %s250 = sphi 0, %s236
      %s258 = sphi 0, %s260
      %s261 = sphi 0, %s258
      %s262 = sphi 0, %s261
      %s278 = sphi 0, %s262
      %s286 = sphi 0, %s288
      %s289 = sphi 0, %s286
      %s290 = sphi 0, %s289
      %s306 = sphi 0, %s290
      %s314 = sphi 0, %s316
      %s317 = sphi 0, %s314
      %s318 = sphi 0, %s317
      %s334 = sphi 0, %s318
    $region4: #{tpu_custom_call.1} parent=1 // loop_header_branch
      %27 = sbr.rel (%p25) target = $region8
    $region5: #{tpu_custom_call.1} parent=1 // loop_body
      %s29 = ssub.s32 %s24, 1
      %s30 = ssub.s32 %s24, 2
      %s37 = sadd.s32 1, %s32
      %p38 = scmp.ge.s32.totalorder %s37, 1
      %s39 = scalar_select %p38, 0, %s37
      %s40 = sadd.s32 1, %s31
      %s41 = scalar_select %p38, %s40, %s31
      %p42 = scmp.ge.s32.totalorder %s41, 2
      %s43 = scalar_select %p42, 0, %s41
      %s44 = ssub.s32 %s31, %s43
      %s45 = ssub.s32 %s32, %s39
      %s46 = sor.u32 %s44, %s45
      %p47 = scmp.eq.s32.totalorder %s46, 0
      %s49 = sadd.s32 %s48, 1
      %s50 = scalar_select %p47, %s48, %s49
      %p53 = pneg %p47
      %p54 = scmp.eq.s32.totalorder %s24, 1
      %p55 = por %p53, %p54
      %p56 = scmp.ne.s32.totalorder %s48, %s51
      %p57 = scmp.eq.s32.totalorder %s24, 0
      %p58 = por %p56, %p57
      %p59 = scmp.ne.s32.totalorder %s48, %s51
      %p60 = scmp.eq.s32.totalorder %s29, 1
      %p61 = por %p59, %p60
      %p62 = scmp.ne.s32.totalorder %s51, %s52
      %p63 = scmp.eq.s32.totalorder %s29, 0
      %p64 = por %p62, %p63
      %p65 = scmp.ne.s32.totalorder %s51, %s52
      %p66 = scmp.eq.s32.totalorder %s30, 1
      %p67 = por %p65, %p66
      %p69 = scmp.ne.s32.totalorder %s52, %s68
      %p70 = scmp.eq.s32.totalorder %s30, 0
      %p71 = por %p69, %p70
      %s72 = ssub.s32 %s31, %s43
      %s73 = ssub.s32 %s32, %s39
      %s74 = sor.u32 %s72, %s73
      %p75 = scmp.eq.s32.totalorder %s74, 0
      %s77 = sadd.s32 %s76, 1
      %s78 = scalar_select %p75, %s76, %s77
      %p81 = pneg %p75
      %p82 = scmp.eq.s32.totalorder %s24, 1
      %p83 = por %p81, %p82
      %p84 = scmp.ne.s32.totalorder %s76, %s79
      %p85 = scmp.eq.s32.totalorder %s24, 0
      %p86 = por %p84, %p85
      %p87 = scmp.ne.s32.totalorder %s76, %s79
      %p88 = scmp.eq.s32.totalorder %s29, 1
      %p89 = por %p87, %p88
      %p90 = scmp.ne.s32.totalorder %s79, %s80
      %p91 = scmp.eq.s32.totalorder %s29, 0
      %p92 = por %p90, %p91
      %p93 = scmp.ne.s32.totalorder %s79, %s80
      %p94 = scmp.eq.s32.totalorder %s30, 1
      %p95 = por %p93, %p94
      %p97 = scmp.ne.s32.totalorder %s80, %s96
      %p98 = scmp.eq.s32.totalorder %s30, 0
      %p99 = por %p97, %p98
      %s100 = ssub.s32 %s31, %s43
      %s101 = ssub.s32 %s32, %s39
      %s102 = sor.u32 %s100, %s101
      %p103 = scmp.eq.s32.totalorder %s102, 0
      %s105 = sadd.s32 %s104, 1
      %s106 = scalar_select %p103, %s104, %s105
      %p109 = pneg %p103
      %p110 = scmp.eq.s32.totalorder %s24, 1
      %p111 = por %p109, %p110
      %p112 = scmp.ne.s32.totalorder %s104, %s107
      %p113 = scmp.eq.s32.totalorder %s24, 0
      %p114 = por %p112, %p113
      %p115 = scmp.ne.s32.totalorder %s104, %s107
      %p116 = scmp.eq.s32.totalorder %s29, 1
      %p117 = por %p115, %p116
      %p118 = scmp.ne.s32.totalorder %s107, %s108
      %p119 = scmp.eq.s32.totalorder %s29, 0
      %p120 = por %p118, %p119
      %p121 = scmp.ne.s32.totalorder %s107, %s108
      %p122 = scmp.eq.s32.totalorder %s30, 1
      %p123 = por %p121, %p122
      %p125 = scmp.ne.s32.totalorder %s108, %s124
      %p126 = scmp.eq.s32.totalorder %s30, 0
      %p127 = por %p125, %p126
      %s129 = sadd.s32 %s128, 1
      %p132 = scmp.eq.s32.totalorder %s24, 1
      %p133 = scmp.ne.s32.totalorder %s128, %s130
      %p134 = scmp.eq.s32.totalorder %s24, 0
      %p135 = por %p133, %p134
      %p136 = scmp.ne.s32.totalorder %s128, %s130
      %p137 = scmp.eq.s32.totalorder %s29, 1
      %p138 = por %p136, %p137
      %p139 = scmp.ne.s32.totalorder %s130, %s131
      %p140 = scmp.eq.s32.totalorder %s29, 0
      %p141 = por %p139, %p140
      %p142 = scmp.ne.s32.totalorder %s130, %s131
      %p143 = scmp.eq.s32.totalorder %s30, 1
      %p144 = por %p142, %p143
      %p146 = scmp.ne.s32.totalorder %s131, %s145
      %p147 = scmp.eq.s32.totalorder %s30, 0
      %p148 = por %p146, %p147
      %s150 = sadd.s32 %s149, 1
      %p153 = scmp.eq.s32.totalorder %s24, 1
      %p154 = scmp.ne.s32.totalorder %s149, %s151
      %p155 = scmp.eq.s32.totalorder %s24, 0
      %p156 = por %p154, %p155
      %p157 = scmp.ne.s32.totalorder %s149, %s151
      %p158 = scmp.eq.s32.totalorder %s29, 1
      %p159 = por %p157, %p158
      %p160 = scmp.ne.s32.totalorder %s151, %s152
      %p161 = scmp.eq.s32.totalorder %s29, 0
      %p162 = por %p160, %p161
      %p163 = scmp.ne.s32.totalorder %s151, %s152
      %p164 = scmp.eq.s32.totalorder %s30, 1
      %p165 = por %p163, %p164
      %p167 = scmp.ne.s32.totalorder %s152, %s166
      %p168 = scmp.eq.s32.totalorder %s30, 0
      %p169 = por %p167, %p168
      %s171 = sadd.s32 %s170, 1
      %p174 = scmp.eq.s32.totalorder %s24, 1
      %p175 = scmp.ne.s32.totalorder %s170, %s172
      %p176 = scmp.eq.s32.totalorder %s24, 0
      %p177 = por %p175, %p176
      %p178 = scmp.ne.s32.totalorder %s170, %s172
      %p179 = scmp.eq.s32.totalorder %s29, 1
      %p180 = por %p178, %p179
      %p181 = scmp.ne.s32.totalorder %s172, %s173
      %p182 = scmp.eq.s32.totalorder %s29, 0
      %p183 = por %p181, %p182
      %p184 = scmp.ne.s32.totalorder %s172, %s173
      %p185 = scmp.eq.s32.totalorder %s30, 1
      %p186 = por %p184, %p185
      %p188 = scmp.ne.s32.totalorder %s173, %s187
      %p189 = scmp.eq.s32.totalorder %s30, 0
      %p190 = por %p188, %p189
      %s192 = sadd.s32 %s191, 1
      %p195 = scmp.eq.s32.totalorder %s24, 1
      %p196 = scmp.ne.s32.totalorder %s191, %s193
      %p197 = scmp.eq.s32.totalorder %s24, 0
      %p198 = por %p196, %p197
      %p199 = scmp.ne.s32.totalorder %s191, %s193
      %p200 = scmp.eq.s32.totalorder %s29, 1
      %p201 = por %p199, %p200
      %p202 = scmp.ne.s32.totalorder %s193, %s194
      %p203 = scmp.eq.s32.totalorder %s29, 0
      %p204 = por %p202, %p203
      %p205 = scmp.ne.s32.totalorder %s193, %s194
      %p206 = scmp.eq.s32.totalorder %s30, 1
      %p207 = por %p205, %p206
      %p209 = scmp.ne.s32.totalorder %s194, %s208
      %p210 = scmp.eq.s32.totalorder %s30, 0
      %p211 = por %p209, %p210
      %s213 = sadd.s32 %s212, 1
      %p216 = scmp.eq.s32.totalorder %s24, 1
      %p217 = scmp.ne.s32.totalorder %s212, %s214
      %p218 = scmp.eq.s32.totalorder %s24, 0
      %p219 = por %p217, %p218
      %p220 = scmp.ne.s32.totalorder %s212, %s214
      %p221 = scmp.eq.s32.totalorder %s29, 1
      %p222 = por %p220, %p221
      %p223 = scmp.ne.s32.totalorder %s214, %s215
      %p224 = scmp.eq.s32.totalorder %s29, 0
      %p225 = por %p223, %p224
      %p226 = scmp.ne.s32.totalorder %s214, %s215
      %p227 = scmp.eq.s32.totalorder %s30, 1
      %p228 = por %p226, %p227
      %p230 = scmp.ne.s32.totalorder %s215, %s229
      %p231 = scmp.eq.s32.totalorder %s30, 0
      %p232 = por %p230, %p231
      %s234 = sadd.s32 %s233, 1
      %p237 = scmp.eq.s32.totalorder %s24, 1
      %p238 = scmp.ne.s32.totalorder %s233, %s235
      %p239 = scmp.eq.s32.totalorder %s24, 0
      %p240 = por %p238, %p239
      %p241 = scmp.ne.s32.totalorder %s233, %s235
      %p242 = scmp.eq.s32.totalorder %s29, 1
      %p243 = por %p241, %p242
      %p244 = scmp.ne.s32.totalorder %s235, %s236
      %p245 = scmp.eq.s32.totalorder %s29, 0
      %p246 = por %p244, %p245
      %p247 = scmp.ne.s32.totalorder %s235, %s236
      %p248 = scmp.eq.s32.totalorder %s30, 1
      %p249 = por %p247, %p248
      %p251 = scmp.ne.s32.totalorder %s236, %s250
      %p252 = scmp.eq.s32.totalorder %s30, 0
      %p253 = por %p251, %p252
      %s254 = ssub.s32 %s31, %s43
      %s255 = ssub.s32 %s32, %s39
      %s256 = sor.u32 %s254, %s255
      %p257 = scmp.eq.s32.totalorder %s256, 0
      %s259 = sadd.s32 %s258, 1
      %s260 = scalar_select %p257, %s258, %s259
      %p263 = pneg %p257
      %p264 = scmp.eq.s32.totalorder %s24, 1
      %p265 = por %p263, %p264
      %p266 = scmp.ne.s32.totalorder %s258, %s261
      %p267 = scmp.eq.s32.totalorder %s24, 0
      %p268 = por %p266, %p267
      %p269 = scmp.ne.s32.totalorder %s258, %s261
      %p270 = scmp.eq.s32.totalorder %s29, 1
      %p271 = por %p269, %p270
      %p272 = scmp.ne.s32.totalorder %s261, %s262
      %p273 = scmp.eq.s32.totalorder %s29, 0
      %p274 = por %p272, %p273
      %p275 = scmp.ne.s32.totalorder %s261, %s262
      %p276 = scmp.eq.s32.totalorder %s30, 1
      %p277 = por %p275, %p276
      %p279 = scmp.ne.s32.totalorder %s262, %s278
      %p280 = scmp.eq.s32.totalorder %s30, 0
      %p281 = por %p279, %p280
      %s282 = ssub.s32 %s31, %s43
      %s283 = ssub.s32 %s32, %s39
      %s284 = sor.u32 %s282, %s283
      %p285 = scmp.eq.s32.totalorder %s284, 0
      %s287 = sadd.s32 %s286, 1
      %s288 = scalar_select %p285, %s286, %s287
      %p291 = pneg %p285
      %p292 = scmp.eq.s32.totalorder %s24, 1
      %p293 = por %p291, %p292
      %p294 = scmp.ne.s32.totalorder %s286, %s289
      %p295 = scmp.eq.s32.totalorder %s24, 0
      %p296 = por %p294, %p295
      %p297 = scmp.ne.s32.totalorder %s286, %s289
      %p298 = scmp.eq.s32.totalorder %s29, 1
      %p299 = por %p297, %p298
      %p300 = scmp.ne.s32.totalorder %s289, %s290
      %p301 = scmp.eq.s32.totalorder %s29, 0
      %p302 = por %p300, %p301
      %p303 = scmp.ne.s32.totalorder %s289, %s290
      %p304 = scmp.eq.s32.totalorder %s30, 1
      %p305 = por %p303, %p304
      %p307 = scmp.ne.s32.totalorder %s290, %s306
      %p308 = scmp.eq.s32.totalorder %s30, 0
      %p309 = por %p307, %p308
      %s310 = ssub.s32 %s31, %s43
      %s311 = ssub.s32 %s32, %s39
      %s312 = sor.u32 %s310, %s311
      %p313 = scmp.eq.s32.totalorder %s312, 0
      %s315 = sadd.s32 %s314, 1
      %s316 = scalar_select %p313, %s314, %s315
      %p319 = pneg %p313
      %p320 = scmp.eq.s32.totalorder %s24, 1
      %p321 = por %p319, %p320
      %p322 = scmp.ne.s32.totalorder %s314, %s317
      %p323 = scmp.eq.s32.totalorder %s24, 0
      %p324 = por %p322, %p323
      %p325 = scmp.ne.s32.totalorder %s314, %s317
      %p326 = scmp.eq.s32.totalorder %s29, 1
      %p327 = por %p325, %p326
      %p328 = scmp.ne.s32.totalorder %s317, %s318
      %p329 = scmp.eq.s32.totalorder %s29, 0
      %p330 = por %p328, %p329
      %p331 = scmp.ne.s32.totalorder %s317, %s318
      %p332 = scmp.eq.s32.totalorder %s30, 1
      %p333 = por %p331, %p332
      %p335 = scmp.ne.s32.totalorder %s318, %s334
      %p336 = scmp.eq.s32.totalorder %s30, 0
      %p337 = por %p335, %p336
      %p338 = scmp.le.s32.totalorder 1, %s24
      %p339 = scmp.lt.s32.totalorder %s24, 3
      %p340 = pnand %p338, %p339
      %p341 = pneg %p340
      // Predicated region
      $region9: #{tpu_custom_call.1} parent=5 // pred_check
        _
      $region10: #{tpu_custom_call.1} parent=5 // pred_check_branch
        %343 = sbr.rel (%p340) target = $region12
      $region11: #{tpu_custom_call.1} parent=5 // pred_region
        %s344 = ssub.s32 %s24, 1
        // Predicated region
        $region13: #{tpu_custom_call.1} parent=11 // pred_check
          %p345 = pneg %p141
        $region14: #{tpu_custom_call.1} parent=11 // pred_check_branch
          %347 = sbr.rel (%p345) target = $region16
        $region15: #{tpu_custom_call.1} parent=11 // pred_region
          _
        $region16: #{tpu_custom_call.1} parent=11 // pred_fallthru
          _
        // Predicated region
        $region17: #{tpu_custom_call.1} parent=11 // pred_check
          %p348 = pneg %p162
        $region18: #{tpu_custom_call.1} parent=11 // pred_check_branch
          %350 = sbr.rel (%p348) target = $region20
        $region19: #{tpu_custom_call.1} parent=11 // pred_region
          _
        $region20: #{tpu_custom_call.1} parent=11 // pred_fallthru
          _
        // Predicated region
        $region21: #{tpu_custom_call.1} parent=11 // pred_check
          %p351 = pneg %p183
        $region22: #{tpu_custom_call.1} parent=11 // pred_check_branch
          %353 = sbr.rel (%p351) target = $region24
        $region23: #{tpu_custom_call.1} parent=11 // pred_region
          _
        $region24: #{tpu_custom_call.1} parent=11 // pred_fallthru
          _
        // Predicated region
        $region25: #{tpu_custom_call.1} parent=11 // pred_check
          %p354 = pneg %p204
        $region26: #{tpu_custom_call.1} parent=11 // pred_check_branch
          %356 = sbr.rel (%p354) target = $region28
        $region27: #{tpu_custom_call.1} parent=11 // pred_region
          _
        $region28: #{tpu_custom_call.1} parent=11 // pred_fallthru
          _
        // Predicated region
        $region29: #{tpu_custom_call.1} parent=11 // pred_check
          %p357 = pneg %p225
        $region30: #{tpu_custom_call.1} parent=11 // pred_check_branch
          %359 = sbr.rel (%p357) target = $region32
        $region31: #{tpu_custom_call.1} parent=11 // pred_region
          _
        $region32: #{tpu_custom_call.1} parent=11 // pred_fallthru
          _
        // Predicated region
        $region33: #{tpu_custom_call.1} parent=11 // pred_check
          %p360 = pneg %p246
        $region34: #{tpu_custom_call.1} parent=11 // pred_check_branch
          %362 = sbr.rel (%p360) target = $region36
        $region35: #{tpu_custom_call.1} parent=11 // pred_region
          _
        $region36: #{tpu_custom_call.1} parent=11 // pred_fallthru
          _
      $region12: #{tpu_custom_call.1} parent=5 // pred_fallthru
        _
      %p363 = scmp.lt.s32.totalorder %s24, 2
      // Predicated region
      $region37: #{tpu_custom_call.1} parent=5 // pred_check
        %p364 = pneg %p363
      $region38: #{tpu_custom_call.1} parent=5 // pred_check_branch
        %366 = sbr.rel (%p364) target = $region40
      $region39: #{tpu_custom_call.1} parent=5 // pred_region
        // Predicated region
        $region41: #{tpu_custom_call.1} parent=39 // pred_check
          %p367 = pneg %p58
        $region42: #{tpu_custom_call.1} parent=39 // pred_check_branch
          %369 = sbr.rel (%p367) target = $region44
        $region43: #{tpu_custom_call.1} parent=39 // pred_region
          %p370 = scmp.lt.s32.totalorder %s31, 1
          %s371 = scalar_select %p370, %s31, 1
          %p372 = scmp.lt.s32.totalorder %s32, 0
          %s373 = scalar_select %p372, %s32, 0
          %s374 = sadd.s32 %s373, %s371
          %s375 = smul.addr %s374, 8
          %s376 = scalar_lea.vmem %s0, %s375
        $region44: #{tpu_custom_call.1} parent=39 // pred_fallthru
          _
        // Predicated region
        $region45: #{tpu_custom_call.1} parent=39 // pred_check
          %p377 = pneg %p86
        $region46: #{tpu_custom_call.1} parent=39 // pred_check_branch
          %379 = sbr.rel (%p377) target = $region48
        $region47: #{tpu_custom_call.1} parent=39 // pred_region
          %p380 = scmp.lt.s32.totalorder %s31, 1
          %s381 = scalar_select %p380, %s31, 1
          %p382 = scmp.lt.s32.totalorder %s32, 0
          %s383 = scalar_select %p382, %s32, 0
          %s384 = sadd.s32 %s383, %s381
          %s385 = smul.addr %s384, 8
          %s386 = scalar_lea.vmem %s1, %s385
        $region48: #{tpu_custom_call.1} parent=39 // pred_fallthru
          _
        // Predicated region
        $region49: #{tpu_custom_call.1} parent=39 // pred_check
          %p387 = pneg %p114
        $region50: #{tpu_custom_call.1} parent=39 // pred_check_branch
          %389 = sbr.rel (%p387) target = $region52
        $region51: #{tpu_custom_call.1} parent=39 // pred_region
          %p390 = scmp.lt.s32.totalorder %s31, 1
          %s391 = scalar_select %p390, %s31, 1
          %p392 = scmp.lt.s32.totalorder %s32, 0
          %s393 = scalar_select %p392, %s32, 0
          %s394 = sadd.s32 %s393, %s391
          %s395 = smul.addr %s394, 8
          %s396 = scalar_lea.vmem %s2, %s395
        $region52: #{tpu_custom_call.1} parent=39 // pred_fallthru
          _
      $region40: #{tpu_custom_call.1} parent=5 // pred_fallthru
        _
      %p397 = scmp.le.s32.totalorder 1, %s24
      %p398 = scmp.lt.s32.totalorder %s24, 3
      %p399 = pnand %p397, %p398
      %p400 = pneg %p399
      // Predicated region
      $region53: #{tpu_custom_call.1} parent=5 // pred_check
        _
      $region54: #{tpu_custom_call.1} parent=5 // pred_check_branch
        %402 = sbr.rel (%p399) target = $region56
      $region55: #{tpu_custom_call.1} parent=5 // pred_region
        %s403 = ssub.s32 %s24, 1
        %p404 = scmp.lt.s32.totalorder %s33, 1
        %s405 = scalar_select %p404, %s33, 1
        %p406 = scmp.lt.s32.totalorder %s34, 0
        %s407 = scalar_select %p406, %s34, 0
        %s408 = sadd.s32 %s407, %s405
        %s409 = smul.addr %s408, 8
        %s410 = scalar_lea.vmem %s0, %s409
        %p411 = pneg %p64
        %p412 = pneg %p61
        %p413 = scmp.lt.s32.totalorder %s33, 1
        %s414 = scalar_select %p413, %s33, 1
        %p415 = scmp.lt.s32.totalorder %s34, 0
        %s416 = scalar_select %p415, %s34, 0
        %s417 = sadd.s32 %s416, %s414
        %s418 = smul.addr %s417, 8
        %s419 = scalar_lea.vmem %s1, %s418
        %p420 = pneg %p92
        %p421 = pneg %p89
        %p422 = scmp.lt.s32.totalorder %s33, 1
        %s423 = scalar_select %p422, %s33, 1
        %p424 = scmp.lt.s32.totalorder %s34, 0
        %s425 = scalar_select %p424, %s34, 0
        %s426 = sadd.s32 %s425, %s423
        %s427 = smul.addr %s426, 8
        %s428 = scalar_lea.vmem %s2, %s427
        %p429 = pneg %p120
        %p430 = pneg %p117
        %p431 = pneg %p141
        %p432 = pneg %p138
        %p433 = pneg %p162
        %p434 = pneg %p159
        %p435 = pneg %p183
        %p436 = pneg %p180
        %p437 = pneg %p204
        %p438 = pneg %p201
        %p439 = pneg %p225
        %p440 = pneg %p222
        %p441 = pneg %p246
        %p442 = pneg %p243
        %p443 = pneg %p274
        %p444 = pneg %p271
        %s445 = sand.u32 %s261, 1
        %s446 = scalar_lea.sflag [#allocation3], %s445
        %s447 = sand.u32 %s261, 1
        %s448 = smul.addr %s447, 16
        %s449 = scalar_lea.vmem [#allocation2], %s448
        %p450 = pneg %p302
        %p451 = pneg %p299
        %s452 = sand.u32 %s29, 1
        %s453 = scalar_lea.sflag [#allocation5], %s452
        %s454 = sand.u32 %s289, 1
        %s455 = smul.addr %s454, 16
        %s456 = scalar_lea.vmem [#allocation4], %s455
        %p457 = pneg %p330
        %p458 = pneg %p327
        %s459 = sand.u32 %s29, 1
        %s460 = scalar_lea.sflag [#allocation5], %s459
        %s461 = sand.u32 %s317, 1
        %s462 = smul.addr %s461, 16
        %s463 = scalar_lea.vmem [#allocation6], %s462
        %p464 = scmp.lt.s32.totalorder %s33, 1
        %s465 = scalar_select %p464, %s33, 1
        %p466 = scmp.lt.s32.totalorder %s34, 0
        %s467 = scalar_select %p466, %s34, 0
        %s468 = sadd.s32 %s467, %s465
        %s469 = smul.addr %s468, 8
        %s470 = scalar_lea.vmem %s0, %s469
        %p471 = scmp.lt.s32.totalorder %s33, 1
        %s472 = scalar_select %p471, %s33, 1
        %p473 = scmp.lt.s32.totalorder %s34, 0
        %s474 = scalar_select %p473, %s34, 0
        %s475 = sadd.s32 %s474, %s472
        %s476 = smul.addr %s475, 8
        %s477 = scalar_lea.vmem %s1, %s476
        %p478 = scmp.lt.s32.totalorder %s33, 1
        %s479 = scalar_select %p478, %s33, 1
        %p480 = scmp.lt.s32.totalorder %s34, 0
        %s481 = scalar_select %p480, %s34, 0
        %s482 = sadd.s32 %s481, %s479
        %s483 = smul.addr %s482, 8
        %s484 = scalar_lea.vmem %s2, %s483
        %v486 = vld [vmem:[%s470] sm:$0xff]
        %v487 = vpack.c.bf16 %v486, %v486
        %v488 = vld [vmem:[%s3] sm:$0xf]
        %v489 = vld [vmem:[%s3 + $0x4] sm:$0xf]
        %v490 = vld [vmem:[%s3 + $0x8] sm:$0xf]
        %v491 = vld [vmem:[%s3 + $0xc] sm:$0xf]
        %v492 = vld [vmem:[%s6] sm:$0x1]
        %v494 = vperm.slane %v492, 0
        %v500 = vunpack.c.l.b16 %v488
        %v501 = vunpack.c.l.b16 %v489
        %v502 = vunpack.c.l.b16 %v490
        %v503 = vunpack.c.l.b16 %v491
        %v504 = vpack.c.b16 %v501, %v500
        %v505 = vpack.c.b16 %v503, %v502
        %vm508 = vcmask 261120
        %v510 = vsel %vm508, %v487, 0
        %512 = vmatpush.bf16.msra.mxu0 0
        %513 = vmatpush.bf16.msra.mxu0 0
        %514 = vmatpush.bf16.msra.mxu0 0
        %515 = vmatpush.bf16.msra.mxu0 0
        %516 = vmatpush.bf16.msra.mxu0 0
        %517 = vmatpush.bf16.msra.mxu0 0
        %518 = vmatpush.bf16.msra.mxu0 %v505
        %519 = vmatpush.bf16.msra.mxu0 %v504
        %520 = vmatmul.bf16.gmra.mxu0 %v510
        %v521 = vpop.f32.mrf.mxu0
        %v522 = vadd.f32 %v494, %v521
        %v523 = vpop.f32.mrf.mxu0
        %524 = vdwg.mxu0
        %v525 = vpack.c.bf16 %v522, %v522
        %vm526 = vcmask 60416
        %527 = vst.msk [vmem:[%s449] sm:$0xf] %vm526, %v525
        %s528 = scalar_lea.vmem %s3, 16
        %v529 = vld [vmem:[%s528] sm:$0xf]
        %v530 = vld [vmem:[%s528 + $0x4] sm:$0xf]
        %v531 = vld [vmem:[%s528 + $0x8] sm:$0xf]
        %v532 = vld [vmem:[%s528 + $0xc] sm:$0xf]
        %s533 = scalar_lea.vmem %s6, 1
        %v534 = vld [vmem:[%s533] sm:$0x1]
        %v536 = vperm.slane %v534, 0
        %v542 = vunpack.c.l.b16 %v529
        %v543 = vunpack.c.l.b16 %v530
        %v544 = vunpack.c.l.b16 %v531
        %v545 = vunpack.c.l.b16 %v532
        %v546 = vpack.c.b16 %v543, %v542
        %v547 = vpack.c.b16 %v545, %v544
        %550 = vmatpush.bf16.msra.mxu0 0
        %551 = vmatpush.bf16.msra.mxu0 0
        %552 = vmatpush.bf16.msra.mxu0 0
        %553 = vmatpush.bf16.msra.mxu0 0
        %554 = vmatpush.bf16.msra.mxu0 0
        %555 = vmatpush.bf16.msra.mxu0 0
        %556 = vmatpush.bf16.msra.mxu0 %v547
        %557 = vmatpush.bf16.msra.mxu0 %v546
        %558 = vmatmul.bf16.gmra.mxu0 %v510
        %v559 = vpop.f32.mrf.mxu0
        %v560 = vadd.f32 %v536, %v559
        %v561 = vpop.f32.mrf.mxu0
        %562 = vdwg.mxu0
        %v563 = vpack.c.bf16 %v560, %v560
        %s564 = scalar_lea.vmem %s449, 4 [#allocation2]
        %565 = vst.msk [vmem:[%s564] sm:$0xf] %vm526, %v563
        %s566 = scalar_lea.vmem %s3, 32
        %v567 = vld [vmem:[%s566] sm:$0xf]
        %v568 = vld [vmem:[%s566 + $0x4] sm:$0xf]
        %v569 = vld [vmem:[%s566 + $0x8] sm:$0xf]
        %v570 = vld [vmem:[%s566 + $0xc] sm:$0xf]
        %s571 = scalar_lea.vmem %s6, 2
        %v572 = vld [vmem:[%s571] sm:$0x1]
        %v574 = vperm.slane %v572, 0
        %v580 = vunpack.c.l.b16 %v567
        %v581 = vunpack.c.l.b16 %v568
        %v582 = vunpack.c.l.b16 %v569
        %v583 = vunpack.c.l.b16 %v570
        %v584 = vpack.c.b16 %v581, %v580
        %v585 = vpack.c.b16 %v583, %v582
        %588 = vmatpush.bf16.msra.mxu0 0
        %589 = vmatpush.bf16.msra.mxu0 0
        %590 = vmatpush.bf16.msra.mxu0 0
        %591 = vmatpush.bf16.msra.mxu0 0
        %592 = vmatpush.bf16.msra.mxu0 0
        %593 = vmatpush.bf16.msra.mxu0 0
        %594 = vmatpush.bf16.msra.mxu0 %v585
        %595 = vmatpush.bf16.msra.mxu0 %v584
        %596 = vmatmul.bf16.gmra.mxu0 %v510
        %v597 = vpop.f32.mrf.mxu0
        %v598 = vadd.f32 %v574, %v597
        %v599 = vpop.f32.mrf.mxu0
        %600 = vdwg.mxu0
        %v601 = vpack.c.bf16 %v598, %v598
        %s602 = scalar_lea.vmem %s449, 8 [#allocation2]
        %603 = vst.msk [vmem:[%s602] sm:$0xf] %vm526, %v601
        %s604 = scalar_lea.vmem %s3, 48
        %v605 = vld [vmem:[%s604] sm:$0xf]
        %v606 = vld [vmem:[%s604 + $0x4] sm:$0xf]
        %v607 = vld [vmem:[%s604 + $0x8] sm:$0xf]
        %v608 = vld [vmem:[%s604 + $0xc] sm:$0xf]
        %s609 = scalar_lea.vmem %s6, 3
        %v610 = vld [vmem:[%s609] sm:$0x1]
        %v612 = vperm.slane %v610, 0
        %v618 = vunpack.c.l.b16 %v605
        %v619 = vunpack.c.l.b16 %v606
        %v620 = vunpack.c.l.b16 %v607
        %v621 = vunpack.c.l.b16 %v608
        %v622 = vpack.c.b16 %v619, %v618
        %v623 = vpack.c.b16 %v621, %v620
        %626 = vmatpush.bf16.msra.mxu0 0
        %627 = vmatpush.bf16.msra.mxu0 0
        %628 = vmatpush.bf16.msra.mxu0 0
        %629 = vmatpush.bf16.msra.mxu0 0
        %630 = vmatpush.bf16.msra.mxu0 0
        %631 = vmatpush.bf16.msra.mxu0 0
        %632 = vmatpush.bf16.msra.mxu0 %v623
        %633 = vmatpush.bf16.msra.mxu0 %v622
        %634 = vmatmul.bf16.gmra.mxu0 %v510
        %v635 = vpop.f32.mrf.mxu0
        %v636 = vadd.f32 %v612, %v635
        %v637 = vpop.f32.mrf.mxu0
        %638 = vdwg.mxu0
        %v639 = vpack.c.bf16 %v636, %v636
        %s640 = scalar_lea.vmem %s449, 12 [#allocation2]
        %641 = vst.msk [vmem:[%s640] sm:$0xf] %vm526, %v639
        %v642 = vld [vmem:[%s477] sm:$0xff]
        %v643 = vpack.c.bf16 %v642, %v642
        %v644 = vld [vmem:[%s4] sm:$0xf]
        %v645 = vld [vmem:[%s4 + $0x4] sm:$0xf]
        %v646 = vld [vmem:[%s4 + $0x8] sm:$0xf]
        %v647 = vld [vmem:[%s4 + $0xc] sm:$0xf]
        %v648 = vld [vmem:[%s7] sm:$0x1]
        %v650 = vperm.slane %v648, 0
        %v656 = vunpack.c.l.b16 %v644
        %v657 = vunpack.c.l.b16 %v645
        %v658 = vunpack.c.l.b16 %v646
        %v659 = vunpack.c.l.b16 %v647
        %v660 = vpack.c.b16 %v657, %v656
        %v661 = vpack.c.b16 %v659, %v658
        %v665 = vsel %vm508, %v643, 0
        %667 = vmatpush.bf16.msra.mxu0 0
        %668 = vmatpush.bf16.msra.mxu0 0
        %669 = vmatpush.bf16.msra.mxu0 0
        %670 = vmatpush.bf16.msra.mxu0 0
        %671 = vmatpush.bf16.msra.mxu0 0
        %672 = vmatpush.bf16.msra.mxu0 0
        %673 = vmatpush.bf16.msra.mxu0 %v661
        %674 = vmatpush.bf16.msra.mxu0 %v660
        %675 = vmatmul.bf16.gmra.mxu0 %v665
        %v676 = vpop.f32.mrf.mxu0
        %v677 = vadd.f32 %v650, %v676
        %v678 = vpop.f32.mrf.mxu0
        %679 = vdwg.mxu0
        %v680 = vpack.c.bf16 %v677, %v677
        %681 = vst.msk [vmem:[%s456] sm:$0xf] %vm526, %v680
        %s682 = scalar_lea.vmem %s4, 16
        %v683 = vld [vmem:[%s682] sm:$0xf]
        %v684 = vld [vmem:[%s682 + $0x4] sm:$0xf]
        %v685 = vld [vmem:[%s682 + $0x8] sm:$0xf]
        %v686 = vld [vmem:[%s682 + $0xc] sm:$0xf]
        %s687 = scalar_lea.vmem %s7, 1
        %v688 = vld [vmem:[%s687] sm:$0x1]
        %v690 = vperm.slane %v688, 0
        %v696 = vunpack.c.l.b16 %v683
        %v697 = vunpack.c.l.b16 %v684
        %v698 = vunpack.c.l.b16 %v685
        %v699 = vunpack.c.l.b16 %v686
        %v700 = vpack.c.b16 %v697, %v696
        %v701 = vpack.c.b16 %v699, %v698
        %704 = vmatpush.bf16.msra.mxu0 0
        %705 = vmatpush.bf16.msra.mxu0 0
        %706 = vmatpush.bf16.msra.mxu0 0
        %707 = vmatpush.bf16.msra.mxu0 0
        %708 = vmatpush.bf16.msra.mxu0 0
        %709 = vmatpush.bf16.msra.mxu0 0
        %710 = vmatpush.bf16.msra.mxu0 %v701
        %711 = vmatpush.bf16.msra.mxu0 %v700
        %712 = vmatmul.bf16.gmra.mxu0 %v665
        %v713 = vpop.f32.mrf.mxu0
        %v714 = vadd.f32 %v690, %v713
        %v715 = vpop.f32.mrf.mxu0
        %716 = vdwg.mxu0
        %v717 = vpack.c.bf16 %v714, %v714
        %s718 = scalar_lea.vmem %s456, 4 [#allocation4]
        %719 = vst.msk [vmem:[%s718] sm:$0xf] %vm526, %v717
        %s720 = scalar_lea.vmem %s4, 32
        %v721 = vld [vmem:[%s720] sm:$0xf]
        %v722 = vld [vmem:[%s720 + $0x4] sm:$0xf]
        %v723 = vld [vmem:[%s720 + $0x8] sm:$0xf]
        %v724 = vld [vmem:[%s720 + $0xc] sm:$0xf]
        %s725 = scalar_lea.vmem %s7, 2
        %v726 = vld [vmem:[%s725] sm:$0x1]
        %v728 = vperm.slane %v726, 0
        %v734 = vunpack.c.l.b16 %v721
        %v735 = vunpack.c.l.b16 %v722
        %v736 = vunpack.c.l.b16 %v723
        %v737 = vunpack.c.l.b16 %v724
        %v738 = vpack.c.b16 %v735, %v734
        %v739 = vpack.c.b16 %v737, %v736
        %742 = vmatpush.bf16.msra.mxu0 0
        %743 = vmatpush.bf16.msra.mxu0 0
        %744 = vmatpush.bf16.msra.mxu0 0
        %745 = vmatpush.bf16.msra.mxu0 0
        %746 = vmatpush.bf16.msra.mxu0 0
        %747 = vmatpush.bf16.msra.mxu0 0
        %748 = vmatpush.bf16.msra.mxu0 %v739
        %749 = vmatpush.bf16.msra.mxu0 %v738
        %750 = vmatmul.bf16.gmra.mxu0 %v665
        %v751 = vpop.f32.mrf.mxu0
        %v752 = vadd.f32 %v728, %v751
        %v753 = vpop.f32.mrf.mxu0
        %754 = vdwg.mxu0
        %v755 = vpack.c.bf16 %v752, %v752
        %s756 = scalar_lea.vmem %s456, 8 [#allocation4]
        %757 = vst.msk [vmem:[%s756] sm:$0xf] %vm526, %v755
        %s758 = scalar_lea.vmem %s4, 48
        %v759 = vld [vmem:[%s758] sm:$0xf]
        %v760 = vld [vmem:[%s758 + $0x4] sm:$0xf]
        %v761 = vld [vmem:[%s758 + $0x8] sm:$0xf]
        %v762 = vld [vmem:[%s758 + $0xc] sm:$0xf]
        %s763 = scalar_lea.vmem %s7, 3
        %v764 = vld [vmem:[%s763] sm:$0x1]
        %v766 = vperm.slane %v764, 0
        %v772 = vunpack.c.l.b16 %v759
        %v773 = vunpack.c.l.b16 %v760
        %v774 = vunpack.c.l.b16 %v761
        %v775 = vunpack.c.l.b16 %v762
        %v776 = vpack.c.b16 %v773, %v772
        %v777 = vpack.c.b16 %v775, %v774
        %780 = vmatpush.bf16.msra.mxu0 0
        %781 = vmatpush.bf16.msra.mxu0 0
        %782 = vmatpush.bf16.msra.mxu0 0
        %783 = vmatpush.bf16.msra.mxu0 0
        %784 = vmatpush.bf16.msra.mxu0 0
        %785 = vmatpush.bf16.msra.mxu0 0
        %786 = vmatpush.bf16.msra.mxu0 %v777
        %787 = vmatpush.bf16.msra.mxu0 %v776
        %788 = vmatmul.bf16.gmra.mxu0 %v665
        %v789 = vpop.f32.mrf.mxu0
        %v790 = vadd.f32 %v766, %v789
        %v791 = vpop.f32.mrf.mxu0
        %792 = vdwg.mxu0
        %v793 = vpack.c.bf16 %v790, %v790
        %s794 = scalar_lea.vmem %s456, 12 [#allocation4]
        %795 = vst.msk [vmem:[%s794] sm:$0xf] %vm526, %v793
        %v796 = vld [vmem:[%s484] sm:$0xff]
        %v797 = vpack.c.bf16 %v796, %v796
        %v798 = vld [vmem:[%s5] sm:$0xf]
        %v799 = vld [vmem:[%s5 + $0x4] sm:$0xf]
        %v800 = vld [vmem:[%s5 + $0x8] sm:$0xf]
        %v801 = vld [vmem:[%s5 + $0xc] sm:$0xf]
        %v802 = vld [vmem:[%s8] sm:$0x1]
        %v804 = vperm.slane %v802, 0
        %v810 = vunpack.c.l.b16 %v798
        %v811 = vunpack.c.l.b16 %v799
        %v812 = vunpack.c.l.b16 %v800
        %v813 = vunpack.c.l.b16 %v801
        %v814 = vpack.c.b16 %v811, %v810
        %v815 = vpack.c.b16 %v813, %v812
        %v819 = vsel %vm508, %v797, 0
        %821 = vmatpush.bf16.msra.mxu0 0
        %822 = vmatpush.bf16.msra.mxu0 0
        %823 = vmatpush.bf16.msra.mxu0 0
        %824 = vmatpush.bf16.msra.mxu0 0
        %825 = vmatpush.bf16.msra.mxu0 0
        %826 = vmatpush.bf16.msra.mxu0 0
        %827 = vmatpush.bf16.msra.mxu0 %v815
        %828 = vmatpush.bf16.msra.mxu0 %v814
        %829 = vmatmul.bf16.gmra.mxu0 %v819
        %v830 = vpop.f32.mrf.mxu0
        %v831 = vadd.f32 %v804, %v830
        %v832 = vpop.f32.mrf.mxu0
        %833 = vdwg.mxu0
        %v834 = vpack.c.bf16 %v831, %v831
        %835 = vst.msk [vmem:[%s463] sm:$0xf] %vm526, %v834
        %s836 = scalar_lea.vmem %s5, 16
        %v837 = vld [vmem:[%s836] sm:$0xf]
        %v838 = vld [vmem:[%s836 + $0x4] sm:$0xf]
        %v839 = vld [vmem:[%s836 + $0x8] sm:$0xf]
        %v840 = vld [vmem:[%s836 + $0xc] sm:$0xf]
        %s841 = scalar_lea.vmem %s8, 1
        %v842 = vld [vmem:[%s841] sm:$0x1]
        %v844 = vperm.slane %v842, 0
        %v850 = vunpack.c.l.b16 %v837
        %v851 = vunpack.c.l.b16 %v838
        %v852 = vunpack.c.l.b16 %v839
        %v853 = vunpack.c.l.b16 %v840
        %v854 = vpack.c.b16 %v851, %v850
        %v855 = vpack.c.b16 %v853, %v852
        %858 = vmatpush.bf16.msra.mxu0 0
        %859 = vmatpush.bf16.msra.mxu0 0
        %860 = vmatpush.bf16.msra.mxu0 0
        %861 = vmatpush.bf16.msra.mxu0 0
        %862 = vmatpush.bf16.msra.mxu0 0
        %863 = vmatpush.bf16.msra.mxu0 0
        %864 = vmatpush.bf16.msra.mxu0 %v855
        %865 = vmatpush.bf16.msra.mxu0 %v854
        %866 = vmatmul.bf16.gmra.mxu0 %v819
        %v867 = vpop.f32.mrf.mxu0
        %v868 = vadd.f32 %v844, %v867
        %v869 = vpop.f32.mrf.mxu0
        %870 = vdwg.mxu0
        %v871 = vpack.c.bf16 %v868, %v868
        %s872 = scalar_lea.vmem %s463, 4 [#allocation6]
        %873 = vst.msk [vmem:[%s872] sm:$0xf] %vm526, %v871
        %s874 = scalar_lea.vmem %s5, 32
        %v875 = vld [vmem:[%s874] sm:$0xf]
        %v876 = vld [vmem:[%s874 + $0x4] sm:$0xf]
        %v877 = vld [vmem:[%s874 + $0x8] sm:$0xf]
        %v878 = vld [vmem:[%s874 + $0xc] sm:$0xf]
        %s879 = scalar_lea.vmem %s8, 2
        %v880 = vld [vmem:[%s879] sm:$0x1]
        %v882 = vperm.slane %v880, 0
        %v888 = vunpack.c.l.b16 %v875
        %v889 = vunpack.c.l.b16 %v876
        %v890 = vunpack.c.l.b16 %v877
        %v891 = vunpack.c.l.b16 %v878
        %v892 = vpack.c.b16 %v889, %v888
        %v893 = vpack.c.b16 %v891, %v890
        %896 = vmatpush.bf16.msra.mxu0 0
        %897 = vmatpush.bf16.msra.mxu0 0
        %898 = vmatpush.bf16.msra.mxu0 0
        %899 = vmatpush.bf16.msra.mxu0 0
        %900 = vmatpush.bf16.msra.mxu0 0
        %901 = vmatpush.bf16.msra.mxu0 0
        %902 = vmatpush.bf16.msra.mxu0 %v893
        %903 = vmatpush.bf16.msra.mxu0 %v892
        %904 = vmatmul.bf16.gmra.mxu0 %v819
        %v905 = vpop.f32.mrf.mxu0
        %v906 = vadd.f32 %v882, %v905
        %v907 = vpop.f32.mrf.mxu0
        %908 = vdwg.mxu0
        %v909 = vpack.c.bf16 %v906, %v906
        %s910 = scalar_lea.vmem %s463, 8 [#allocation6]
        %911 = vst.msk [vmem:[%s910] sm:$0xf] %vm526, %v909
        %s912 = scalar_lea.vmem %s5, 48
        %v913 = vld [vmem:[%s912] sm:$0xf]
        %v914 = vld [vmem:[%s912 + $0x4] sm:$0xf]
        %v915 = vld [vmem:[%s912 + $0x8] sm:$0xf]
        %v916 = vld [vmem:[%s912 + $0xc] sm:$0xf]
        %s917 = scalar_lea.vmem %s8, 3
        %v918 = vld [vmem:[%s917] sm:$0x1]
        %v920 = vperm.slane %v918, 0
        %v926 = vunpack.c.l.b16 %v913
        %v927 = vunpack.c.l.b16 %v914
        %v928 = vunpack.c.l.b16 %v915
        %v929 = vunpack.c.l.b16 %v916
        %v930 = vpack.c.b16 %v927, %v926
        %v931 = vpack.c.b16 %v929, %v928
        %934 = vmatpush.bf16.msra.mxu0 0
        %935 = vmatpush.bf16.msra.mxu0 0
        %936 = vmatpush.bf16.msra.mxu0 0
        %937 = vmatpush.bf16.msra.mxu0 0
        %938 = vmatpush.bf16.msra.mxu0 0
        %939 = vmatpush.bf16.msra.mxu0 0
        %940 = vmatpush.bf16.msra.mxu0 %v931
        %941 = vmatpush.bf16.msra.mxu0 %v930
        %942 = vmatmul.bf16.gmra.mxu0 %v819
        %v943 = vpop.f32.mrf.mxu0
        %v944 = vadd.f32 %v920, %v943
        %v945 = vpop.f32.mrf.mxu0
        %946 = vdwg.mxu0
        %v947 = vpack.c.bf16 %v944, %v944
        %s948 = scalar_lea.vmem %s463, 12 [#allocation6]
        %949 = vst.msk [vmem:[%s948] sm:$0xf] %vm526, %v947
        %s950 = sand.u32 %s261, 1
        %s951 = scalar_lea.sflag [#allocation3], %s950
        %s952 = sand.u32 %s261, 1
        %s953 = smul.addr %s952, 16
        %s954 = scalar_lea.vmem [#allocation2], %s953
        %s955 = sand.u32 %s29, 1
        %s956 = scalar_lea.sflag [#allocation5], %s955
        %s957 = sand.u32 %s289, 1
        %s958 = smul.addr %s957, 16
        %s959 = scalar_lea.vmem [#allocation4], %s958
        %s960 = sand.u32 %s29, 1
        %s961 = scalar_lea.sflag [#allocation5], %s960
        %s962 = sand.u32 %s317, 1
        %s963 = smul.addr %s962, 16
        %s964 = scalar_lea.vmem [#allocation6], %s963
        // Predicated region
        $region57: #{tpu_custom_call.1} parent=55 // pred_check
          %p965 = pneg %p271
        $region58: #{tpu_custom_call.1} parent=55 // pred_check_branch
          %967 = sbr.rel (%p965) target = $region60
        $region59: #{tpu_custom_call.1} parent=55 // pred_region
          %969 = vsyncadd %s951, 0
          %s970 = smul.addr %s33, 4
          %s971 = sadd.s32 %s34, %s970
          %s972 = smul.addr %s971, 4
          %s973 = scalar_lea.hbm %s9, %s972
          %s974 = sshll.u32 %s954, 4
          %s975 = int_to_ptr.vmem [resolvable:$true] %s974
          %s976 = sshll.u32 %s973, 4
          %s977 = int_to_ptr.hbm [resolvable:$true] %s976
          %982 = dma.vmem_to_hbm [thread:$0]  %s975, 256, %s977, %s951, 64, 64, 4
        $region60: #{tpu_custom_call.1} parent=55 // pred_fallthru
          _
        // Predicated region
        $region61: #{tpu_custom_call.1} parent=55 // pred_check
          %p983 = pneg %p299
        $region62: #{tpu_custom_call.1} parent=55 // pred_check_branch
          %985 = sbr.rel (%p983) target = $region64
        $region63: #{tpu_custom_call.1} parent=55 // pred_region
          %987 = vsyncadd %s956, 0
          %s988 = smul.addr %s33, 4
          %s989 = sadd.s32 %s34, %s988
          %s990 = smul.addr %s989, 4
          %s991 = scalar_lea.hbm %s10, %s990
          %s992 = sshll.u32 %s959, 4
          %s993 = int_to_ptr.vmem [resolvable:$true] %s992
          %s994 = sshll.u32 %s991, 4
          %s995 = int_to_ptr.hbm [resolvable:$true] %s994
          %1000 = dma.vmem_to_hbm [thread:$0]  %s993, 256, %s995, %s956, 64, 64, 4
        $region64: #{tpu_custom_call.1} parent=55 // pred_fallthru
          _
        // Predicated region
        $region65: #{tpu_custom_call.1} parent=55 // pred_check
          %p1001 = pneg %p327
        $region66: #{tpu_custom_call.1} parent=55 // pred_check_branch
          %1003 = sbr.rel (%p1001) target = $region68
        $region67: #{tpu_custom_call.1} parent=55 // pred_region
          %1005 = vsyncadd %s961, 0
          %s1006 = smul.addr %s33, 4
          %s1007 = sadd.s32 %s34, %s1006
          %s1008 = smul.addr %s1007, 4
          %s1009 = scalar_lea.hbm %s11, %s1008
          %s1010 = sshll.u32 %s964, 4
          %s1011 = int_to_ptr.vmem [resolvable:$true] %s1010
          %s1012 = sshll.u32 %s1009, 4
          %s1013 = int_to_ptr.hbm [resolvable:$true] %s1012
          %1018 = dma.vmem_to_hbm [thread:$0]  %s1011, 256, %s1013, %s961, 64, 64, 4
        $region68: #{tpu_custom_call.1} parent=55 // pred_fallthru
          _
      $region56: #{tpu_custom_call.1} parent=5 // pred_fallthru
        _
      %p1019 = scmp.le.s32.totalorder 2, %s24
      // Predicated region
      $region69: #{tpu_custom_call.1} parent=5 // pred_check
        %p1020 = pneg %p1019
      $region70: #{tpu_custom_call.1} parent=5 // pred_check_branch
        %1022 = sbr.rel (%p1020) target = $region72
      $region71: #{tpu_custom_call.1} parent=5 // pred_region
        %s1023 = ssub.s32 %s24, 2
        // Predicated region
        $region73: #{tpu_custom_call.1} parent=71 // pred_check
          %p1024 = pneg %p277
        $region74: #{tpu_custom_call.1} parent=71 // pred_check_branch
          %1026 = sbr.rel (%p1024) target = $region76
        $region75: #{tpu_custom_call.1} parent=71 // pred_region
          %s1027 = sand.u32 %s262, 1
          %s1028 = scalar_lea.sflag [#allocation3], %s1027
          %s1029 = sand.u32 %s262, 1
          %s1030 = smul.addr %s1029, 16
          %s1031 = scalar_lea.vmem [#allocation2], %s1030
          %1033 = dma.done %s1028, 256
        $region76: #{tpu_custom_call.1} parent=71 // pred_fallthru
          _
        // Predicated region
        $region77: #{tpu_custom_call.1} parent=71 // pred_check
          %p1034 = pneg %p305
        $region78: #{tpu_custom_call.1} parent=71 // pred_check_branch
          %1036 = sbr.rel (%p1034) target = $region80
        $region79: #{tpu_custom_call.1} parent=71 // pred_region
          %s1037 = sand.u32 %s30, 1
          %s1038 = scalar_lea.sflag [#allocation5], %s1037
          %s1039 = sand.u32 %s290, 1
          %s1040 = smul.addr %s1039, 16
          %s1041 = scalar_lea.vmem [#allocation4], %s1040
          %1043 = dma.done %s1038, 256
        $region80: #{tpu_custom_call.1} parent=71 // pred_fallthru
          _
        // Predicated region
        $region81: #{tpu_custom_call.1} parent=71 // pred_check
          %p1044 = pneg %p333
        $region82: #{tpu_custom_call.1} parent=71 // pred_check_branch
          %1046 = sbr.rel (%p1044) target = $region84
        $region83: #{tpu_custom_call.1} parent=71 // pred_region
          %s1047 = sand.u32 %s30, 1
          %s1048 = scalar_lea.sflag [#allocation5], %s1047
          %s1049 = sand.u32 %s318, 1
          %s1050 = smul.addr %s1049, 16
          %s1051 = scalar_lea.vmem [#allocation6], %s1050
          %1053 = dma.done %s1048, 256
        $region84: #{tpu_custom_call.1} parent=71 // pred_fallthru
          _
      $region72: #{tpu_custom_call.1} parent=5 // pred_fallthru
        _
    $region6: #{tpu_custom_call.1} parent=1 // loop_footer
      %s28 = sadd.s32 1, %s24
    $region7: #{tpu_custom_call.1} parent=1 // loop_footer_branch
      %23 = sbr.rel target = $region3
    $region8: #{tpu_custom_call.1} parent=1 // loop_exit
      _
    %1054 = vsyncpa [#allocation3], 1
    %s1055 = scalar_lea.sflag [#allocation3], 1
    %1056 = vsyncpa %s1055, 1
    %1057 = vsyncpa [#allocation5], 1
    %s1058 = scalar_lea.sflag [#allocation5], 1
    %1059 = vsyncpa %s1058, 1

</llo_original>
